<compile_context>
chip_gen: v6e
topology: v6e:2x2x1
jax: 0.10.0
libtpu: 0.0.40
codegen_flags: <defaults>
</compile_context>

<pallas_src>
import jax
import jax.numpy as jnp
from jax.experimental import pallas as pl
from jax.experimental.pallas import tpu as pltpu


def _vae_kernel(cat_ref, x_ref, eps_ref,
                w_e1, b_e1, w_e2, b_e2, w_ml, w_cat, b_ml,
                w_d1z, b_d1, w_d2, b_d2, w_d3, b_d3,
                recon_ref, mu_ref, logvar_ref):
    f32, bf16 = jnp.float32, jnp.bfloat16
    tb = x_ref.shape[0]
    zd = mu_ref.shape[-1]
    cdims = w_cat.shape[0]

    # ---- encoder: LinearBlock(xdims,512) -> LinearBlock(512,128) ----------
    x = x_ref[...].astype(bf16)                     # in-kernel cast (VPU, free)
    h = jnp.dot(x, w_e1[...], preferred_element_type=f32) + b_e1[...]
    h = jnp.maximum(h, 0.0).astype(bf16)
    h = jnp.dot(h, w_e2[...], preferred_element_type=f32) + b_e2[...]
    h = jnp.maximum(h, 0.0)                         # stays f32 for mu/logvar dot

    # ---- category: one-hot built in-kernel; one tiny K=C dot covers both the
    #      mu|logvar and the decoder-layer-1 category contributions ----------
    iota = jax.lax.broadcasted_iota(jnp.int32, (tb, cdims), 1)
    onehot = (iota == cat_ref[...]).astype(f32)                 # (TB, C)
    cat_all = jnp.dot(onehot, w_cat[...], preferred_element_type=f32)
    cat_ml = cat_all[:, :2 * zd]                                # -> mu|logvar
    cat_d1 = cat_all[:, 2 * zd:]                                # -> decoder l1

    # ---- fused mu|logvar: single (TB,128)@(128,2*zdims) dot, f32 throughout
    ml = jnp.dot(h, w_ml[...], preferred_element_type=f32) + cat_ml + b_ml[...]
    mu = ml[:, :zd]
    logvar = ml[:, zd:]

    # ---- reparameterization: z = mu + exp(0.5*logvar) * eps (f32 VPU/EUP) --
    z = mu + jnp.exp(0.5 * logvar) * eps_ref[...]

    # ---- decoder: LinearBlock(zdims+C,128) -> LinearBlock(128,512) -> Linear
    d = (jnp.dot(z.astype(bf16), w_d1z[...], preferred_element_type=f32)
         + cat_d1 + b_d1[...])
    d = jnp.maximum(d, 0.0).astype(bf16)
    d = jnp.dot(d, w_d2[...], preferred_element_type=f32) + b_d2[...]
    d = jnp.maximum(d, 0.0).astype(bf16)
    recon = jnp.dot(d, w_d3[...], preferred_element_type=f32) + b_d3[...]

    recon_ref[...] = recon
    mu_ref[...] = mu
    logvar_ref[...] = logvar


def pack_params(params):
    """One-time packing of weights for the kernel (not a per-call cost)."""
    bf = lambda a: a.astype(jnp.bfloat16)
    w_ml = jnp.concatenate([params["w_mu"], params["w_lv"]], axis=1)        # f32
    w_cat = jnp.concatenate(
        [params["w_mu_c"], params["w_lv_c"], params["w_d1_c"]], axis=1)     # f32
    b_ml = jnp.concatenate([params["b_mu"], params["b_lv"]], axis=1)        # f32
    return (bf(params["w_e1"]), params["b_e1"],
            bf(params["w_e2"]), params["b_e2"],
            w_ml, w_cat, b_ml,                     # mu/logvar path stays f32
            bf(params["w_d1_z"]), params["b_d1"],
            bf(params["w_d2"]), params["b_d2"],
            bf(params["w_d3"]), params["b_d3"])


def vae_forward(x, category, eps, packed, *, zdims, category_dims,
                block_batch=512):
    """Fused VAE forward. Returns (recon, mu, logvar), all float32."""
    B, xdims = x.shape
    TB = pl.cdiv(min(block_batch, B), 8) * 8       # sublane-aligned batch tile
    grid = (pl.cdiv(B, TB),)                       # ragged last block is fine

    cat2d = category.astype(jnp.int32).reshape(B, 1)   # 4 B/row index stream

    tiled = lambda a: pl.BlockSpec((TB, a.shape[1]), lambda i: (i, 0))
    resident = lambda a: pl.BlockSpec(a.shape, lambda i: (0, 0))

    act_inputs = (cat2d, x, eps)
    in_specs = [tiled(a) for a in act_inputs] + [resident(w) for w in packed]

    out_shape = (jax.ShapeDtypeStruct((B, xdims), jnp.float32),
                 jax.ShapeDtypeStruct((B, zdims), jnp.float32),
                 jax.ShapeDtypeStruct((B, zdims), jnp.float32))
    out_specs = (pl.BlockSpec((TB, xdims), lambda i: (i, 0)),
                 pl.BlockSpec((TB, zdims), lambda i: (i, 0)),
                 pl.BlockSpec((TB, zdims), lambda i: (i, 0)))

    # --- advisory cost estimate + a VMEM budget that is valid on v7x --------
    rows = grid[0] * TB
    flops_per_row = 2 * (xdims * 512 + 512 * 128 + 128 * 2 * zdims
                         + category_dims * (2 * zdims + 128)
                         + zdims * 128 + 128 * 512 + 512 * xdims)
    bytes_rows = rows * (4 + x.dtype.itemsize * xdims + 4 * zdims   # cat, x, eps
                         + 4 * xdims + 8 * zdims)                   # recon, mu, lv
    bytes_w = sum(int(w.size) * w.dtype.itemsize for w in packed)
    cost = pl.CostEstimate(flops=rows * flops_per_row,
                           transcendentals=rows * zdims,
                           bytes_accessed=bytes_rows + bytes_w)

    stream_vmem = 2 * TB * (4 + x.dtype.itemsize * xdims + 4 * zdims
                            + 4 * xdims + 8 * zdims)       # double-buffered tiles
    scratch_vmem = 4 * TB * (512 + 512 + 2 * zdims + 2 * zdims + 128 + 512)
    vmem_limit = int(min(max(2 * bytes_w + stream_vmem + scratch_vmem + (4 << 20),
                             16 << 20), 48 << 20))

    recon, mu, logvar = pl.pallas_call(
        _vae_kernel,
        out_shape=out_shape,
        grid=grid,
        in_specs=in_specs,
        out_specs=out_specs,
        compiler_params=pltpu.CompilerParams(
            dimension_semantics=("parallel",),
            vmem_limit_bytes=vmem_limit),
        cost_estimate=cost,
    )(*act_inputs, *packed)

    return recon, mu, logvar


def init_params(key, xdims, category_dims, zdims):
    """Synthetic parameters, (in_features, out_features) layout, float32."""
    ks = jax.random.split(key, 7)

    def lin(k, fan_in, fan_out):
        scale = 1.0 / jnp.sqrt(fan_in)
        w = jax.random.uniform(k, (fan_in, fan_out), jnp.float32, -scale, scale)
        b = jnp.zeros((1, fan_out), jnp.float32)
        return w, b

    p = {}
    p["w_e1"], p["b_e1"] = lin(ks[0], xdims, 512)
    p["w_e2"], p["b_e2"] = lin(ks[1], 512, 128)
    # mu_logvar_layer: Linear(128 + C, 2*zdims) split row-wise (x | cat) and
    # column-wise (mu | logvar).
    w_ml, b_ml = lin(ks[2], 128 + category_dims, 2 * zdims)
    p["w_mu"], p["w_lv"] = w_ml[:128, :zdims], w_ml[:128, zdims:]
    p["w_mu_c"], p["w_lv_c"] = w_ml[128:, :zdims], w_ml[128:, zdims:]
    p["b_mu"], p["b_lv"] = b_ml[:, :zdims], b_ml[:, zdims:]
    # decoder[0]: Linear(zdims + C, 128) split row-wise (z | cat).
    w_d1, p["b_d1"] = lin(ks[3], zdims + category_dims, 128)
    p["w_d1_z"], p["w_d1_c"] = w_d1[:zdims], w_d1[zdims:]
    p["w_d2"], p["b_d2"] = lin(ks[4], 128, 512)
    p["w_d3"], p["b_d3"] = lin(ks[5], 512, xdims)
    return p


def vae_reference(x, category, eps, params, *, zdims, category_dims):
    """Pure-JAX f32 reference mirroring the PyTorch forward (concat form)."""
    relu = lambda v: jnp.maximum(v, 0.0)
    h = relu(x @ params["w_e1"] + params["b_e1"])
    h = relu(h @ params["w_e2"] + params["b_e2"])
    onehot = jax.nn.one_hot(category, category_dims, dtype=jnp.float32)
    w_ml = jnp.concatenate(
        [jnp.concatenate([params["w_mu"], params["w_lv"]], axis=1),
         jnp.concatenate([params["w_mu_c"], params["w_lv_c"]], axis=1)], axis=0)
    b_ml = jnp.concatenate([params["b_mu"], params["b_lv"]], axis=1)
    ml = jnp.concatenate([h, onehot], axis=1) @ w_ml + b_ml
    mu, logvar = ml[:, :zdims], ml[:, zdims:]
    z = mu + jnp.exp(0.5 * logvar) * eps
    w_d1 = jnp.concatenate([params["w_d1_z"], params["w_d1_c"]], axis=0)
    d = relu(jnp.concatenate([z, onehot], axis=1) @ w_d1 + params["b_d1"])
    d = relu(d @ params["w_d2"] + params["b_d2"])
    recon = d @ params["w_d3"] + params["b_d3"]
    return recon, mu, logvar


if __name__ == "__main__":
    # Small test shapes; block_batch=8 forces a multi-step grid with a ragged
    # last block (B=13 -> tiles of 8 -> 2 steps, 3 padded rows) so the
    # no-jnp.pad partial-block path is exercised.
    B, XDIMS, CDIMS, ZDIMS = 13, 256, 16, 128

    key = jax.random.PRNGKey(0)
    k_x, k_c, k_eps, k_p = jax.random.split(key, 4)

    x = jax.random.normal(k_x, (B, XDIMS), jnp.float32)
    category = jax.random.randint(k_c, (B,), 0, CDIMS, jnp.int32)
    eps = jax.random.normal(k_eps, (B, ZDIMS), jnp.float32)
    params = init_params(k_p, XDIMS, CDIMS, ZDIMS)
    packed = pack_params(params)

    r_recon, r_mu, r_logvar = vae_reference(x, category, eps, params,
                                            zdims=ZDIMS, category_dims=CDIMS)

    for bb in (8, 512):   # multi-tile ragged grid, and single-tile TB > B
        recon, mu, logvar = vae_forward(x, category, eps, packed,
                                        zdims=ZDIMS, category_dims=CDIMS,
                                        block_batch=bb)
        jax.block_until_ready((recon, mu, logvar))

        assert recon.shape == (B, XDIMS)
        assert mu.shape == (B, ZDIMS) and logvar.shape == (B, ZDIMS)
        # Encoder/decoder use bf16 weights/activations with f32 accumulation;
        # compare against the f32 reference with a relaxed tolerance.
        assert jnp.allclose(recon, r_recon, rtol=5e-2, atol=5e-2)
        assert jnp.allclose(mu, r_mu, rtol=5e-2, atol=5e-2)
        assert jnp.allclose(logvar, r_logvar, rtol=5e-2, atol=5e-2)

    print("KERNEL_OK")
</pallas_src>

<mosaic_0001>
module attributes {stable_mosaic.version = 11 : i64} {
  func.func @_vae_kernel(%arg0: i32, %arg1: memref<8x1xi32, #tpu.memory_space<vmem>>, %arg2: memref<8x256xf32, #tpu.memory_space<vmem>>, %arg3: memref<8x128xf32, #tpu.memory_space<vmem>>, %arg4: memref<256x512xbf16, #tpu.memory_space<vmem>>, %arg5: memref<1x512xf32, #tpu.memory_space<vmem>>, %arg6: memref<512x128xbf16, #tpu.memory_space<vmem>>, %arg7: memref<1x128xf32, #tpu.memory_space<vmem>>, %arg8: memref<128x256xf32, #tpu.memory_space<vmem>>, %arg9: memref<16x384xf32, #tpu.memory_space<vmem>>, %arg10: memref<1x256xf32, #tpu.memory_space<vmem>>, %arg11: memref<128x128xbf16, #tpu.memory_space<vmem>>, %arg12: memref<1x128xf32, #tpu.memory_space<vmem>>, %arg13: memref<128x512xbf16, #tpu.memory_space<vmem>>, %arg14: memref<1x512xf32, #tpu.memory_space<vmem>>, %arg15: memref<512x256xbf16, #tpu.memory_space<vmem>>, %arg16: memref<1x256xf32, #tpu.memory_space<vmem>>, %arg17: memref<8x256xf32, #tpu.memory_space<vmem>>, %arg18: memref<8x128xf32, #tpu.memory_space<vmem>>, %arg19: memref<8x128xf32, #tpu.memory_space<vmem>>) attributes {dimension_semantics = [#tpu.dimension_semantics<parallel>], iteration_bounds = array<i64: 2>, scalar_prefetch = 0 : i64, scratch_operands = 0 : i64, tpu.core_type = #tpu.core_type<tc>, window_params = [{transform_indices = @transform_0, window_bounds = array<i64: 8, 1>}, {transform_indices = @transform_1, window_bounds = array<i64: 8, 256>}, {transform_indices = @transform_2, window_bounds = array<i64: 8, 128>}, {pipeline_mode = #tpu.pipeline_mode<synchronous>, transform_indices = @transform_3, window_bounds = array<i64: 256, 512>}, {pipeline_mode = #tpu.pipeline_mode<synchronous>, transform_indices = @transform_4, window_bounds = array<i64: 1, 512>}, {pipeline_mode = #tpu.pipeline_mode<synchronous>, transform_indices = @transform_5, window_bounds = array<i64: 512, 128>}, {pipeline_mode = #tpu.pipeline_mode<synchronous>, transform_indices = @transform_6, window_bounds = array<i64: 1, 128>}, {pipeline_mode = #tpu.pipeline_mode<synchronous>, transform_indices = @transform_7, window_bounds = array<i64: 128, 256>}, {pipeline_mode = #tpu.pipeline_mode<synchronous>, transform_indices = @transform_8, window_bounds = array<i64: 16, 384>}, {pipeline_mode = #tpu.pipeline_mode<synchronous>, transform_indices = @transform_9, window_bounds = array<i64: 1, 256>}, {pipeline_mode = #tpu.pipeline_mode<synchronous>, transform_indices = @transform_10, window_bounds = array<i64: 128, 128>}, {pipeline_mode = #tpu.pipeline_mode<synchronous>, transform_indices = @transform_11, window_bounds = array<i64: 1, 128>}, {pipeline_mode = #tpu.pipeline_mode<synchronous>, transform_indices = @transform_12, window_bounds = array<i64: 128, 512>}, {pipeline_mode = #tpu.pipeline_mode<synchronous>, transform_indices = @transform_13, window_bounds = array<i64: 1, 512>}, {pipeline_mode = #tpu.pipeline_mode<synchronous>, transform_indices = @transform_14, window_bounds = array<i64: 512, 256>}, {pipeline_mode = #tpu.pipeline_mode<synchronous>, transform_indices = @transform_15, window_bounds = array<i64: 1, 256>}, {transform_indices = @transform_16, window_bounds = array<i64: 8, 256>}, {transform_indices = @transform_17, window_bounds = array<i64: 8, 128>}, {transform_indices = @transform_18, window_bounds = array<i64: 8, 128>}]} {
    %c0 = arith.constant 0 : index
    %c0_0 = arith.constant 0 : index
    %0 = vector.load %arg2[%c0, %c0_0] : memref<8x256xf32, #tpu.memory_space<vmem>>, vector<8x256xf32>
    %1 = arith.truncf %0 : vector<8x256xf32> to vector<8x256xbf16>
    %c0_1 = arith.constant 0 : index
    %c0_2 = arith.constant 0 : index
    %2 = vector.load %arg4[%c0_1, %c0_2] : memref<256x512xbf16, #tpu.memory_space<vmem>>, vector<256x512xbf16>
    %cst = arith.constant dense<0.000000e+00> : vector<8x512xf32>
    %3 = tpu.matmul %1, %2, %cst {dimension_numbers = #tpu.dot_dimension_numbers<[1], [0], [0], [1], [0, 0, 1, 1], [], []>} : vector<8x256xbf16>, vector<256x512xbf16>, vector<8x512xf32> -> vector<8x512xf32>
    %c0_3 = arith.constant 0 : index
    %c0_4 = arith.constant 0 : index
    %4 = vector.load %arg5[%c0_3, %c0_4] : memref<1x512xf32, #tpu.memory_space<vmem>>, vector<1x512xf32>
    %5 = vector.broadcast %4 : vector<1x512xf32> to vector<8x512xf32>
    %6 = arith.addf %3, %5 : vector<8x512xf32>
    %cst_5 = arith.constant 0.000000e+00 : f32
    %7 = vector.broadcast %cst_5 : f32 to vector<8x512xf32>
    %8 = arith.maximumf %6, %7 : vector<8x512xf32>
    %9 = arith.truncf %8 : vector<8x512xf32> to vector<8x512xbf16>
    %c0_6 = arith.constant 0 : index
    %c0_7 = arith.constant 0 : index
    %10 = vector.load %arg6[%c0_6, %c0_7] : memref<512x128xbf16, #tpu.memory_space<vmem>>, vector<512x128xbf16>
    %cst_8 = arith.constant dense<0.000000e+00> : vector<8x128xf32>
    %11 = tpu.matmul %9, %10, %cst_8 {dimension_numbers = #tpu.dot_dimension_numbers<[1], [0], [0], [1], [0, 0, 1, 1], [], []>} : vector<8x512xbf16>, vector<512x128xbf16>, vector<8x128xf32> -> vector<8x128xf32>
    %c0_9 = arith.constant 0 : index
    %c0_10 = arith.constant 0 : index
    %12 = vector.load %arg7[%c0_9, %c0_10] : memref<1x128xf32, #tpu.memory_space<vmem>>, vector<1x128xf32>
    %13 = vector.broadcast %12 : vector<1x128xf32> to vector<8x128xf32>
    %14 = arith.addf %11, %13 : vector<8x128xf32>
    %cst_11 = arith.constant 0.000000e+00 : f32
    %15 = vector.broadcast %cst_11 : f32 to vector<8x128xf32>
    %16 = arith.maximumf %14, %15 : vector<8x128xf32>
    %17 = tpu.iota {dimensions = array<i32: 1>} : vector<8x16xi32>
    %c0_12 = arith.constant 0 : index
    %c0_13 = arith.constant 0 : index
    %18 = vector.load %arg1[%c0_12, %c0_13] : memref<8x1xi32, #tpu.memory_space<vmem>>, vector<8x1xi32>
    %19 = vector.broadcast %18 : vector<8x1xi32> to vector<8x16xi32>
    %20 = arith.cmpi eq, %17, %19 : vector<8x16xi32>
    %21 = arith.extui %20 : vector<8x16xi1> to vector<8x16xi32>
    %22 = arith.sitofp %21 : vector<8x16xi32> to vector<8x16xf32>
    %c0_14 = arith.constant 0 : index
    %c0_15 = arith.constant 0 : index
    %23 = vector.load %arg9[%c0_14, %c0_15] : memref<16x384xf32, #tpu.memory_space<vmem>>, vector<16x384xf32>
    %cst_16 = arith.constant dense<0.000000e+00> : vector<8x384xf32>
    %24 = tpu.matmul %22, %23, %cst_16 {dimension_numbers = #tpu.dot_dimension_numbers<[1], [0], [0], [1], [0, 0, 1, 1], [], []>} : vector<8x16xf32>, vector<16x384xf32>, vector<8x384xf32> -> vector<8x384xf32>
    %25 = vector.extract_strided_slice %24 {offsets = [0, 0], sizes = [8, 256], strides = [1, 1]} : vector<8x384xf32> to vector<8x256xf32>
    %26 = vector.extract_strided_slice %24 {offsets = [0, 256], sizes = [8, 128], strides = [1, 1]} : vector<8x384xf32> to vector<8x128xf32>
    %c0_17 = arith.constant 0 : index
    %c0_18 = arith.constant 0 : index
    %27 = vector.load %arg8[%c0_17, %c0_18] : memref<128x256xf32, #tpu.memory_space<vmem>>, vector<128x256xf32>
    %cst_19 = arith.constant dense<0.000000e+00> : vector<8x256xf32>
    %28 = tpu.matmul %16, %27, %cst_19 {dimension_numbers = #tpu.dot_dimension_numbers<[1], [0], [0], [1], [0, 0, 1, 1], [], []>} : vector<8x128xf32>, vector<128x256xf32>, vector<8x256xf32> -> vector<8x256xf32>
    %29 = arith.addf %28, %25 : vector<8x256xf32>
    %c0_20 = arith.constant 0 : index
    %c0_21 = arith.constant 0 : index
    %30 = vector.load %arg10[%c0_20, %c0_21] : memref<1x256xf32, #tpu.memory_space<vmem>>, vector<1x256xf32>
    %31 = vector.broadcast %30 : vector<1x256xf32> to vector<8x256xf32>
    %32 = arith.addf %29, %31 : vector<8x256xf32>
    %33 = vector.extract_strided_slice %32 {offsets = [0, 0], sizes = [8, 128], strides = [1, 1]} : vector<8x256xf32> to vector<8x128xf32>
    %34 = vector.extract_strided_slice %32 {offsets = [0, 128], sizes = [8, 128], strides = [1, 1]} : vector<8x256xf32> to vector<8x128xf32>
    %cst_22 = arith.constant 5.000000e-01 : f32
    %35 = vector.broadcast %cst_22 : f32 to vector<8x128xf32>
    %36 = arith.mulf %35, %34 : vector<8x128xf32>
    %37 = math.exp %36 : vector<8x128xf32>
    %c0_23 = arith.constant 0 : index
    %c0_24 = arith.constant 0 : index
    %38 = vector.load %arg3[%c0_23, %c0_24] : memref<8x128xf32, #tpu.memory_space<vmem>>, vector<8x128xf32>
    %39 = arith.mulf %37, %38 : vector<8x128xf32>
    %40 = arith.addf %33, %39 : vector<8x128xf32>
    %41 = arith.truncf %40 : vector<8x128xf32> to vector<8x128xbf16>
    %c0_25 = arith.constant 0 : index
    %c0_26 = arith.constant 0 : index
    %42 = vector.load %arg11[%c0_25, %c0_26] : memref<128x128xbf16, #tpu.memory_space<vmem>>, vector<128x128xbf16>
    %cst_27 = arith.constant dense<0.000000e+00> : vector<8x128xf32>
    %43 = tpu.matmul %41, %42, %cst_27 {dimension_numbers = #tpu.dot_dimension_numbers<[1], [0], [0], [1], [0, 0, 1, 1], [], []>} : vector<8x128xbf16>, vector<128x128xbf16>, vector<8x128xf32> -> vector<8x128xf32>
    %44 = arith.addf %43, %26 : vector<8x128xf32>
    %c0_28 = arith.constant 0 : index
    %c0_29 = arith.constant 0 : index
    %45 = vector.load %arg12[%c0_28, %c0_29] : memref<1x128xf32, #tpu.memory_space<vmem>>, vector<1x128xf32>
    %46 = vector.broadcast %45 : vector<1x128xf32> to vector<8x128xf32>
    %47 = arith.addf %44, %46 : vector<8x128xf32>
    %cst_30 = arith.constant 0.000000e+00 : f32
    %48 = vector.broadcast %cst_30 : f32 to vector<8x128xf32>
    %49 = arith.maximumf %47, %48 : vector<8x128xf32>
    %50 = arith.truncf %49 : vector<8x128xf32> to vector<8x128xbf16>
    %c0_31 = arith.constant 0 : index
    %c0_32 = arith.constant 0 : index
    %51 = vector.load %arg13[%c0_31, %c0_32] : memref<128x512xbf16, #tpu.memory_space<vmem>>, vector<128x512xbf16>
    %cst_33 = arith.constant dense<0.000000e+00> : vector<8x512xf32>
    %52 = tpu.matmul %50, %51, %cst_33 {dimension_numbers = #tpu.dot_dimension_numbers<[1], [0], [0], [1], [0, 0, 1, 1], [], []>} : vector<8x128xbf16>, vector<128x512xbf16>, vector<8x512xf32> -> vector<8x512xf32>
    %c0_34 = arith.constant 0 : index
    %c0_35 = arith.constant 0 : index
    %53 = vector.load %arg14[%c0_34, %c0_35] : memref<1x512xf32, #tpu.memory_space<vmem>>, vector<1x512xf32>
    %54 = vector.broadcast %53 : vector<1x512xf32> to vector<8x512xf32>
    %55 = arith.addf %52, %54 : vector<8x512xf32>
    %cst_36 = arith.constant 0.000000e+00 : f32
    %56 = vector.broadcast %cst_36 : f32 to vector<8x512xf32>
    %57 = arith.maximumf %55, %56 : vector<8x512xf32>
    %58 = arith.truncf %57 : vector<8x512xf32> to vector<8x512xbf16>
    %c0_37 = arith.constant 0 : index
    %c0_38 = arith.constant 0 : index
    %59 = vector.load %arg15[%c0_37, %c0_38] : memref<512x256xbf16, #tpu.memory_space<vmem>>, vector<512x256xbf16>
    %cst_39 = arith.constant dense<0.000000e+00> : vector<8x256xf32>
    %60 = tpu.matmul %58, %59, %cst_39 {dimension_numbers = #tpu.dot_dimension_numbers<[1], [0], [0], [1], [0, 0, 1, 1], [], []>} : vector<8x512xbf16>, vector<512x256xbf16>, vector<8x256xf32> -> vector<8x256xf32>
    %c0_40 = arith.constant 0 : index
    %c0_41 = arith.constant 0 : index
    %61 = vector.load %arg16[%c0_40, %c0_41] : memref<1x256xf32, #tpu.memory_space<vmem>>, vector<1x256xf32>
    %62 = vector.broadcast %61 : vector<1x256xf32> to vector<8x256xf32>
    %63 = arith.addf %60, %62 : vector<8x256xf32>
    %c0_42 = arith.constant 0 : index
    %c0_43 = arith.constant 0 : index
    %64 = vector.load %arg17[%c0_42, %c0_43] : memref<8x256xf32, #tpu.memory_space<vmem>>, vector<8x256xf32>
    tpu.vector_store %arg17[%c0_42, %c0_43], %63 {strides = array<i32>} : memref<8x256xf32, #tpu.memory_space<vmem>>, vector<8x256xf32>,
    %c0_44 = arith.constant 0 : index
    %c0_45 = arith.constant 0 : index
    %65 = vector.load %arg18[%c0_44, %c0_45] : memref<8x128xf32, #tpu.memory_space<vmem>>, vector<8x128xf32>
    tpu.vector_store %arg18[%c0_44, %c0_45], %33 {strides = array<i32>} : memref<8x128xf32, #tpu.memory_space<vmem>>, vector<8x128xf32>,
    %c0_46 = arith.constant 0 : index
    %c0_47 = arith.constant 0 : index
    %66 = vector.load %arg19[%c0_46, %c0_47] : memref<8x128xf32, #tpu.memory_space<vmem>>, vector<8x128xf32>
    tpu.vector_store %arg19[%c0_46, %c0_47], %34 {strides = array<i32>} : memref<8x128xf32, #tpu.memory_space<vmem>>, vector<8x128xf32>,
    return
  }
  func.func @transform_0(%arg0: i32) -> (i32, i32) {
    %c0_i32 = arith.constant 0 : i32
    %c0_i32_0 = arith.constant 0 : i32
    return %arg0, %c0_i32 : i32, i32
  }
  func.func @transform_1(%arg0: i32) -> (i32, i32) {
    %c0_i32 = arith.constant 0 : i32
    %c0_i32_0 = arith.constant 0 : i32
    return %arg0, %c0_i32 : i32, i32
  }
  func.func @transform_2(%arg0: i32) -> (i32, i32) {
    %c0_i32 = arith.constant 0 : i32
    %c0_i32_0 = arith.constant 0 : i32
    return %arg0, %c0_i32 : i32, i32
  }
  func.func @transform_3(%arg0: i32) -> (i32, i32) {
    %c0_i32 = arith.constant 0 : i32
    %c0_i32_0 = arith.constant 0 : i32
    %c0_i32_1 = arith.constant 0 : i32
    return %c0_i32, %c0_i32_0 : i32, i32
  }
  func.func @transform_4(%arg0: i32) -> (i32, i32) {
    %c0_i32 = arith.constant 0 : i32
    %c0_i32_0 = arith.constant 0 : i32
    %c0_i32_1 = arith.constant 0 : i32
    return %c0_i32, %c0_i32_0 : i32, i32
  }
  func.func @transform_5(%arg0: i32) -> (i32, i32) {
    %c0_i32 = arith.constant 0 : i32
    %c0_i32_0 = arith.constant 0 : i32
    %c0_i32_1 = arith.constant 0 : i32
    return %c0_i32, %c0_i32_0 : i32, i32
  }
  func.func @transform_6(%arg0: i32) -> (i32, i32) {
    %c0_i32 = arith.constant 0 : i32
    %c0_i32_0 = arith.constant 0 : i32
    %c0_i32_1 = arith.constant 0 : i32
    return %c0_i32, %c0_i32_0 : i32, i32
  }
  func.func @transform_7(%arg0: i32) -> (i32, i32) {
    %c0_i32 = arith.constant 0 : i32
    %c0_i32_0 = arith.constant 0 : i32
    %c0_i32_1 = arith.constant 0 : i32
    return %c0_i32, %c0_i32_0 : i32, i32
  }
  func.func @transform_8(%arg0: i32) -> (i32, i32) {
    %c0_i32 = arith.constant 0 : i32
    %c0_i32_0 = arith.constant 0 : i32
    %c0_i32_1 = arith.constant 0 : i32
    return %c0_i32, %c0_i32_0 : i32, i32
  }
  func.func @transform_9(%arg0: i32) -> (i32, i32) {
    %c0_i32 = arith.constant 0 : i32
    %c0_i32_0 = arith.constant 0 : i32
    %c0_i32_1 = arith.constant 0 : i32
    return %c0_i32, %c0_i32_0 : i32, i32
  }
  func.func @transform_10(%arg0: i32) -> (i32, i32) {
    %c0_i32 = arith.constant 0 : i32
    %c0_i32_0 = arith.constant 0 : i32
    %c0_i32_1 = arith.constant 0 : i32
    return %c0_i32, %c0_i32_0 : i32, i32
  }
  func.func @transform_11(%arg0: i32) -> (i32, i32) {
    %c0_i32 = arith.constant 0 : i32
    %c0_i32_0 = arith.constant 0 : i32
    %c0_i32_1 = arith.constant 0 : i32
    return %c0_i32, %c0_i32_0 : i32, i32
  }
  func.func @transform_12(%arg0: i32) -> (i32, i32) {
    %c0_i32 = arith.constant 0 : i32
    %c0_i32_0 = arith.constant 0 : i32
    %c0_i32_1 = arith.constant 0 : i32
    return %c0_i32, %c0_i32_0 : i32, i32
  }
  func.func @transform_13(%arg0: i32) -> (i32, i32) {
    %c0_i32 = arith.constant 0 : i32
    %c0_i32_0 = arith.constant 0 : i32
    %c0_i32_1 = arith.constant 0 : i32
    return %c0_i32, %c0_i32_0 : i32, i32
  }
  func.func @transform_14(%arg0: i32) -> (i32, i32) {
    %c0_i32 = arith.constant 0 : i32
    %c0_i32_0 = arith.constant 0 : i32
    %c0_i32_1 = arith.constant 0 : i32
    return %c0_i32, %c0_i32_0 : i32, i32
  }
  func.func @transform_15(%arg0: i32) -> (i32, i32) {
    %c0_i32 = arith.constant 0 : i32
    %c0_i32_0 = arith.constant 0 : i32
    %c0_i32_1 = arith.constant 0 : i32
    return %c0_i32, %c0_i32_0 : i32, i32
  }
  func.func @transform_16(%arg0: i32) -> (i32, i32) {
    %c0_i32 = arith.constant 0 : i32
    %c0_i32_0 = arith.constant 0 : i32
    return %arg0, %c0_i32 : i32, i32
  }
  func.func @transform_17(%arg0: i32) -> (i32, i32) {
    %c0_i32 = arith.constant 0 : i32
    %c0_i32_0 = arith.constant 0 : i32
    return %arg0, %c0_i32 : i32, i32
  }
  func.func @transform_18(%arg0: i32) -> (i32, i32) {
    %c0_i32 = arith.constant 0 : i32
    %c0_i32_0 = arith.constant 0 : i32
    return %arg0, %c0_i32 : i32, i32
  }
}

</mosaic_0001>

<llo_original>
// kernel: tpu_custom_call.1
$region0: #{tpu_custom_call.1}
  #allocation0 [shape = 'u32[]', space=smem, size = 0x4, offset = 0x4, fixed_abs, tag = 'smem constant byte address 0x4 - core index']
  #allocation1 [shape = 'u32[144,128]{1,0:T(1,128)}', space=vmem, size = 0x12000, scoped, tag = 'internal scratch']
  %s0 = inlined_call_operand.vmem [shape: s32[13,1], index: 0, kind: input, shape index: {}]
  %s1 = inlined_call_operand.hbm [shape: f32[13,256], index: 1, kind: input, shape index: {}]
  %s2 = inlined_call_operand.vmem [shape: f32[13,128], index: 2, kind: input, shape index: {}]
  %s3 = inlined_call_operand.hbm [shape: bf16[256,512], index: 3, kind: input, shape index: {}]
  %s4 = inlined_call_operand.vmem [shape: f32[1,512], index: 4, kind: input, shape index: {}]
  %s5 = inlined_call_operand.hbm [shape: bf16[512,128], index: 5, kind: input, shape index: {}]
  %s6 = inlined_call_operand.vmem [shape: f32[1,128], index: 6, kind: input, shape index: {}]
  %s7 = inlined_call_operand.hbm [shape: f32[128,256], index: 7, kind: input, shape index: {}]
  %s8 = inlined_call_operand.hbm [shape: f32[16,384], index: 8, kind: input, shape index: {}]
  %s9 = inlined_call_operand.vmem [shape: f32[1,256], index: 9, kind: input, shape index: {}]
  %s10 = inlined_call_operand.hbm [shape: bf16[128,128], index: 10, kind: input, shape index: {}]
  %s11 = inlined_call_operand.vmem [shape: f32[1,128], index: 11, kind: input, shape index: {}]
  %s12 = inlined_call_operand.hbm [shape: bf16[128,512], index: 12, kind: input, shape index: {}]
  %s13 = inlined_call_operand.vmem [shape: f32[1,512], index: 13, kind: input, shape index: {}]
  %s14 = inlined_call_operand.hbm [shape: bf16[512,256], index: 14, kind: input, shape index: {}]
  %s15 = inlined_call_operand.vmem [shape: f32[1,256], index: 15, kind: input, shape index: {}]
  %s16 = inlined_call_operand.hbm [shape: f32[13,256], index: 16, kind: output, shape index: {0}]
  %s17 = inlined_call_operand.hbm [shape: f32[13,128], index: 17, kind: output, shape index: {1}]
  %s18 = inlined_call_operand.hbm [shape: f32[13,128], index: 18, kind: output, shape index: {2}]
  %19 = xla_tuple %s16, %s17, %s18
  %s20 = sld [smem:[#allocation0]]
  $region145: #{tpu_custom_call.1} parent=0
    _
  %s22 = ssub.s32 1, %s20
  %s23 = scalar_select 0, %s22, %s20
  $region1: #{tpu_custom_call.1} parent=0
    #allocation2 [shape = 'u8[16384]{0}', space=vmem, size = 0x4000, scoped, tag = 'input window, operand 1']
    #allocation3 [shape = 's32[2]{0}', space=sflag, size = 0x8, scoped, tag = 'scoped memory for tpu_custom_call.1']
    #allocation4 [shape = 's32[2]{0}', space=sflag, size = 0x8, scoped, tag = 'scoped memory for tpu_custom_call.1']
    #allocation5 [shape = 'u8[262144]{0}', space=vmem, size = 0x40000, scoped, tag = 'input window, operand 3, single buffered']
    #allocation6 [shape = 's32[1]{0}', space=sflag, size = 0x4, scoped, tag = 'scoped memory for tpu_custom_call.1']
    #allocation7 [shape = 'u8[131072]{0}', space=vmem, size = 0x20000, scoped, tag = 'input window, operand 5, single buffered']
    #allocation8 [shape = 'u8[131072]{0}', space=vmem, size = 0x20000, scoped, tag = 'input window, operand 7, single buffered']
    #allocation9 [shape = 's32[1]{0}', space=sflag, size = 0x4, scoped, tag = 'scoped memory for tpu_custom_call.1']
    #allocation10 [shape = 'u8[24576]{0}', space=vmem, size = 0x6000, scoped, tag = 'input window, operand 8, single buffered']
    #allocation11 [shape = 'u8[32768]{0}', space=vmem, size = 0x8000, scoped, tag = 'input window, operand 10, single buffered']
    #allocation12 [shape = 's32[1]{0}', space=sflag, size = 0x4, scoped, tag = 'scoped memory for tpu_custom_call.1']
    #allocation13 [shape = 'u8[131072]{0}', space=vmem, size = 0x20000, scoped, tag = 'input window, operand 12, single buffered']
    #allocation14 [shape = 'u8[262144]{0}', space=vmem, size = 0x40000, scoped, tag = 'input window, operand 14, single buffered']
    #allocation15 [shape = 's32[1]{0}', space=sflag, size = 0x4, scoped, tag = 'scoped memory for tpu_custom_call.1']
    #allocation16 [shape = 'u8[16384]{0}', space=vmem, size = 0x4000, scoped, tag = 'output window, operand 0']
    #allocation17 [shape = 'u8[8192]{0}', space=vmem, size = 0x2000, scoped, tag = 'output window, operand 1']
    #allocation18 [shape = 's32[2]{0}', space=sflag, size = 0x8, scoped, tag = 'scoped memory for tpu_custom_call.1']
    #allocation19 [shape = 'u8[8192]{0}', space=vmem, size = 0x2000, scoped, tag = 'output window, operand 2']
    %24 = vsyncpa [#allocation3], 0
    %s25 = scalar_lea.sflag [#allocation3], 1
    %26 = vsyncpa %s25, 0
    %27 = vsyncpa [#allocation6], 0
    %28 = vsyncpa [#allocation9], 0
    %29 = vsyncpa [#allocation12], 0
    %30 = vsyncpa [#allocation15], 0
    %31 = vsyncpa [#allocation4], 0
    %s32 = scalar_lea.sflag [#allocation4], 1
    %33 = vsyncpa %s32, 0
    %34 = vsyncpa [#allocation18], 0
    %s35 = scalar_lea.sflag [#allocation18], 1
    %36 = vsyncpa %s35, 0
    loop: start=0, step=1, limit=4
    $region2: #{tpu_custom_call.1} parent=1 // loop_pre_header
      _
    $region3: #{tpu_custom_call.1} parent=1 // loop_header
      %s38 = sphi 0, %s42
      %p39 = scmp.ge.s32.totalorder %s38, 4
      %s48 = sphi 0, %s50
      %s51 = sphi 0, %s48
      %s52 = sphi 0, %s51
      %s68 = sphi 0, %s52
      %s74 = sphi 0, %s76
      %s77 = sphi 0, %s74
      %s78 = sphi 0, %s77
      %s94 = sphi 0, %s78
      %s100 = sphi 0, %s102
      %s103 = sphi 0, %s100
      %s104 = sphi 0, %s103
      %s120 = sphi 0, %s104
      %s124 = sphi 0, %s124
      %s126 = sphi 0, %s124
      %s127 = sphi 0, %s126
      %s141 = sphi 0, %s127
      %s145 = sphi 0, %s145
      %s147 = sphi 0, %s145
      %s148 = sphi 0, %s147
      %s162 = sphi 0, %s148
      %s166 = sphi 0, %s166
      %s168 = sphi 0, %s166
      %s169 = sphi 0, %s168
      %s183 = sphi 0, %s169
      %s187 = sphi 0, %s187
      %s189 = sphi 0, %s187
      %s190 = sphi 0, %s189
      %s204 = sphi 0, %s190
      %s208 = sphi 0, %s208
      %s210 = sphi 0, %s208
      %s211 = sphi 0, %s210
      %s225 = sphi 0, %s211
      %s229 = sphi 0, %s229
      %s231 = sphi 0, %s229
      %s232 = sphi 0, %s231
      %s246 = sphi 0, %s232
      %s250 = sphi 0, %s250
      %s252 = sphi 0, %s250
      %s253 = sphi 0, %s252
      %s267 = sphi 0, %s253
      %s271 = sphi 0, %s271
      %s273 = sphi 0, %s271
      %s274 = sphi 0, %s273
      %s288 = sphi 0, %s274
      %s292 = sphi 0, %s292
      %s294 = sphi 0, %s292
      %s295 = sphi 0, %s294
      %s309 = sphi 0, %s295
      %s313 = sphi 0, %s313
      %s315 = sphi 0, %s313
      %s316 = sphi 0, %s315
      %s330 = sphi 0, %s316
      %s334 = sphi 0, %s334
      %s336 = sphi 0, %s334
      %s337 = sphi 0, %s336
      %s351 = sphi 0, %s337
      %s355 = sphi 0, %s355
      %s357 = sphi 0, %s355
      %s358 = sphi 0, %s357
      %s372 = sphi 0, %s358
      %s376 = sphi 0, %s376
      %s378 = sphi 0, %s376
      %s379 = sphi 0, %s378
      %s393 = sphi 0, %s379
      %s399 = sphi 0, %s401
      %s402 = sphi 0, %s399
      %s403 = sphi 0, %s402
      %s419 = sphi 0, %s403
      %s425 = sphi 0, %s427
      %s428 = sphi 0, %s425
      %s429 = sphi 0, %s428
      %s445 = sphi 0, %s429
      %s451 = sphi 0, %s453
      %s454 = sphi 0, %s451
      %s455 = sphi 0, %s454
      %s471 = sphi 0, %s455
    $region4: #{tpu_custom_call.1} parent=1 // loop_header_branch
      %41 = sbr.rel (%p39) target = $region8
    $region5: #{tpu_custom_call.1} parent=1 // loop_body
      %s43 = ssub.s32 %s38, 1
      %s44 = ssub.s32 %s38, 2
      %s45 = sadd.s32 %s38, 1
      %s46 = ssub.s32 %s38, %s45
      %p47 = scmp.eq.s32.totalorder %s46, 0
      %s49 = sadd.s32 %s48, 1
      %s50 = scalar_select %p47, %s48, %s49
      %p53 = pneg %p47
      %p54 = scmp.eq.s32.totalorder %s38, 1
      %p55 = por %p53, %p54
      %p56 = scmp.ne.s32.totalorder %s48, %s51
      %p57 = scmp.eq.s32.totalorder %s38, 0
      %p58 = por %p56, %p57
      %p59 = scmp.ne.s32.totalorder %s48, %s51
      %p60 = scmp.eq.s32.totalorder %s43, 1
      %p61 = por %p59, %p60
      %p62 = scmp.ne.s32.totalorder %s51, %s52
      %p63 = scmp.eq.s32.totalorder %s43, 0
      %p64 = por %p62, %p63
      %p65 = scmp.ne.s32.totalorder %s51, %s52
      %p66 = scmp.eq.s32.totalorder %s44, 1
      %p67 = por %p65, %p66
      %p69 = scmp.ne.s32.totalorder %s52, %s68
      %p70 = scmp.eq.s32.totalorder %s44, 0
      %p71 = por %p69, %p70
      %s72 = ssub.s32 %s38, %s45
      %p73 = scmp.eq.s32.totalorder %s72, 0
      %s75 = sadd.s32 %s74, 1
      %s76 = scalar_select %p73, %s74, %s75
      %p79 = pneg %p73
      %p80 = scmp.eq.s32.totalorder %s38, 1
      %p81 = por %p79, %p80
      %p82 = scmp.ne.s32.totalorder %s74, %s77
      %p83 = scmp.eq.s32.totalorder %s38, 0
      %p84 = por %p82, %p83
      %p85 = scmp.ne.s32.totalorder %s74, %s77
      %p86 = scmp.eq.s32.totalorder %s43, 1
      %p87 = por %p85, %p86
      %p88 = scmp.ne.s32.totalorder %s77, %s78
      %p89 = scmp.eq.s32.totalorder %s43, 0
      %p90 = por %p88, %p89
      %p91 = scmp.ne.s32.totalorder %s77, %s78
      %p92 = scmp.eq.s32.totalorder %s44, 1
      %p93 = por %p91, %p92
      %p95 = scmp.ne.s32.totalorder %s78, %s94
      %p96 = scmp.eq.s32.totalorder %s44, 0
      %p97 = por %p95, %p96
      %s98 = ssub.s32 %s38, %s45
      %p99 = scmp.eq.s32.totalorder %s98, 0
      %s101 = sadd.s32 %s100, 1
      %s102 = scalar_select %p99, %s100, %s101
      %p105 = pneg %p99
      %p106 = scmp.eq.s32.totalorder %s38, 1
      %p107 = por %p105, %p106
      %p108 = scmp.ne.s32.totalorder %s100, %s103
      %p109 = scmp.eq.s32.totalorder %s38, 0
      %p110 = por %p108, %p109
      %p111 = scmp.ne.s32.totalorder %s100, %s103
      %p112 = scmp.eq.s32.totalorder %s43, 1
      %p113 = por %p111, %p112
      %p114 = scmp.ne.s32.totalorder %s103, %s104
      %p115 = scmp.eq.s32.totalorder %s43, 0
      %p116 = por %p114, %p115
      %p117 = scmp.ne.s32.totalorder %s103, %s104
      %p118 = scmp.eq.s32.totalorder %s44, 1
      %p119 = por %p117, %p118
      %p121 = scmp.ne.s32.totalorder %s104, %s120
      %p122 = scmp.eq.s32.totalorder %s44, 0
      %p123 = por %p121, %p122
      %s125 = sadd.s32 %s124, 1
      %p128 = scmp.eq.s32.totalorder %s38, 1
      %p129 = scmp.ne.s32.totalorder %s124, %s126
      %p130 = scmp.eq.s32.totalorder %s38, 0
      %p131 = por %p129, %p130
      %p132 = scmp.ne.s32.totalorder %s124, %s126
      %p133 = scmp.eq.s32.totalorder %s43, 1
      %p134 = por %p132, %p133
      %p135 = scmp.ne.s32.totalorder %s126, %s127
      %p136 = scmp.eq.s32.totalorder %s43, 0
      %p137 = por %p135, %p136
      %p138 = scmp.ne.s32.totalorder %s126, %s127
      %p139 = scmp.eq.s32.totalorder %s44, 1
      %p140 = por %p138, %p139
      %p142 = scmp.ne.s32.totalorder %s127, %s141
      %p143 = scmp.eq.s32.totalorder %s44, 0
      %p144 = por %p142, %p143
      %s146 = sadd.s32 %s145, 1
      %p149 = scmp.eq.s32.totalorder %s38, 1
      %p150 = scmp.ne.s32.totalorder %s145, %s147
      %p151 = scmp.eq.s32.totalorder %s38, 0
      %p152 = por %p150, %p151
      %p153 = scmp.ne.s32.totalorder %s145, %s147
      %p154 = scmp.eq.s32.totalorder %s43, 1
      %p155 = por %p153, %p154
      %p156 = scmp.ne.s32.totalorder %s147, %s148
      %p157 = scmp.eq.s32.totalorder %s43, 0
      %p158 = por %p156, %p157
      %p159 = scmp.ne.s32.totalorder %s147, %s148
      %p160 = scmp.eq.s32.totalorder %s44, 1
      %p161 = por %p159, %p160
      %p163 = scmp.ne.s32.totalorder %s148, %s162
      %p164 = scmp.eq.s32.totalorder %s44, 0
      %p165 = por %p163, %p164
      %s167 = sadd.s32 %s166, 1
      %p170 = scmp.eq.s32.totalorder %s38, 1
      %p171 = scmp.ne.s32.totalorder %s166, %s168
      %p172 = scmp.eq.s32.totalorder %s38, 0
      %p173 = por %p171, %p172
      %p174 = scmp.ne.s32.totalorder %s166, %s168
      %p175 = scmp.eq.s32.totalorder %s43, 1
      %p176 = por %p174, %p175
      %p177 = scmp.ne.s32.totalorder %s168, %s169
      %p178 = scmp.eq.s32.totalorder %s43, 0
      %p179 = por %p177, %p178
      %p180 = scmp.ne.s32.totalorder %s168, %s169
      %p181 = scmp.eq.s32.totalorder %s44, 1
      %p182 = por %p180, %p181
      %p184 = scmp.ne.s32.totalorder %s169, %s183
      %p185 = scmp.eq.s32.totalorder %s44, 0
      %p186 = por %p184, %p185
      %s188 = sadd.s32 %s187, 1
      %p191 = scmp.eq.s32.totalorder %s38, 1
      %p192 = scmp.ne.s32.totalorder %s187, %s189
      %p193 = scmp.eq.s32.totalorder %s38, 0
      %p194 = por %p192, %p193
      %p195 = scmp.ne.s32.totalorder %s187, %s189
      %p196 = scmp.eq.s32.totalorder %s43, 1
      %p197 = por %p195, %p196
      %p198 = scmp.ne.s32.totalorder %s189, %s190
      %p199 = scmp.eq.s32.totalorder %s43, 0
      %p200 = por %p198, %p199
      %p201 = scmp.ne.s32.totalorder %s189, %s190
      %p202 = scmp.eq.s32.totalorder %s44, 1
      %p203 = por %p201, %p202
      %p205 = scmp.ne.s32.totalorder %s190, %s204
      %p206 = scmp.eq.s32.totalorder %s44, 0
      %p207 = por %p205, %p206
      %s209 = sadd.s32 %s208, 1
      %p212 = scmp.eq.s32.totalorder %s38, 1
      %p213 = scmp.ne.s32.totalorder %s208, %s210
      %p214 = scmp.eq.s32.totalorder %s38, 0
      %p215 = por %p213, %p214
      %p216 = scmp.ne.s32.totalorder %s208, %s210
      %p217 = scmp.eq.s32.totalorder %s43, 1
      %p218 = por %p216, %p217
      %p219 = scmp.ne.s32.totalorder %s210, %s211
      %p220 = scmp.eq.s32.totalorder %s43, 0
      %p221 = por %p219, %p220
      %p222 = scmp.ne.s32.totalorder %s210, %s211
      %p223 = scmp.eq.s32.totalorder %s44, 1
      %p224 = por %p222, %p223
      %p226 = scmp.ne.s32.totalorder %s211, %s225
      %p227 = scmp.eq.s32.totalorder %s44, 0
      %p228 = por %p226, %p227
      %s230 = sadd.s32 %s229, 1
      %p233 = scmp.eq.s32.totalorder %s38, 1
      %p234 = scmp.ne.s32.totalorder %s229, %s231
      %p235 = scmp.eq.s32.totalorder %s38, 0
      %p236 = por %p234, %p235
      %p237 = scmp.ne.s32.totalorder %s229, %s231
      %p238 = scmp.eq.s32.totalorder %s43, 1
      %p239 = por %p237, %p238
      %p240 = scmp.ne.s32.totalorder %s231, %s232
      %p241 = scmp.eq.s32.totalorder %s43, 0
      %p242 = por %p240, %p241
      %p243 = scmp.ne.s32.totalorder %s231, %s232
      %p244 = scmp.eq.s32.totalorder %s44, 1
      %p245 = por %p243, %p244
      %p247 = scmp.ne.s32.totalorder %s232, %s246
      %p248 = scmp.eq.s32.totalorder %s44, 0
      %p249 = por %p247, %p248
      %s251 = sadd.s32 %s250, 1
      %p254 = scmp.eq.s32.totalorder %s38, 1
      %p255 = scmp.ne.s32.totalorder %s250, %s252
      %p256 = scmp.eq.s32.totalorder %s38, 0
      %p257 = por %p255, %p256
      %p258 = scmp.ne.s32.totalorder %s250, %s252
      %p259 = scmp.eq.s32.totalorder %s43, 1
      %p260 = por %p258, %p259
      %p261 = scmp.ne.s32.totalorder %s252, %s253
      %p262 = scmp.eq.s32.totalorder %s43, 0
      %p263 = por %p261, %p262
      %p264 = scmp.ne.s32.totalorder %s252, %s253
      %p265 = scmp.eq.s32.totalorder %s44, 1
      %p266 = por %p264, %p265
      %p268 = scmp.ne.s32.totalorder %s253, %s267
      %p269 = scmp.eq.s32.totalorder %s44, 0
      %p270 = por %p268, %p269
      %s272 = sadd.s32 %s271, 1
      %p275 = scmp.eq.s32.totalorder %s38, 1
      %p276 = scmp.ne.s32.totalorder %s271, %s273
      %p277 = scmp.eq.s32.totalorder %s38, 0
      %p278 = por %p276, %p277
      %p279 = scmp.ne.s32.totalorder %s271, %s273
      %p280 = scmp.eq.s32.totalorder %s43, 1
      %p281 = por %p279, %p280
      %p282 = scmp.ne.s32.totalorder %s273, %s274
      %p283 = scmp.eq.s32.totalorder %s43, 0
      %p284 = por %p282, %p283
      %p285 = scmp.ne.s32.totalorder %s273, %s274
      %p286 = scmp.eq.s32.totalorder %s44, 1
      %p287 = por %p285, %p286
      %p289 = scmp.ne.s32.totalorder %s274, %s288
      %p290 = scmp.eq.s32.totalorder %s44, 0
      %p291 = por %p289, %p290
      %s293 = sadd.s32 %s292, 1
      %p296 = scmp.eq.s32.totalorder %s38, 1
      %p297 = scmp.ne.s32.totalorder %s292, %s294
      %p298 = scmp.eq.s32.totalorder %s38, 0
      %p299 = por %p297, %p298
      %p300 = scmp.ne.s32.totalorder %s292, %s294
      %p301 = scmp.eq.s32.totalorder %s43, 1
      %p302 = por %p300, %p301
      %p303 = scmp.ne.s32.totalorder %s294, %s295
      %p304 = scmp.eq.s32.totalorder %s43, 0
      %p305 = por %p303, %p304
      %p306 = scmp.ne.s32.totalorder %s294, %s295
      %p307 = scmp.eq.s32.totalorder %s44, 1
      %p308 = por %p306, %p307
      %p310 = scmp.ne.s32.totalorder %s295, %s309
      %p311 = scmp.eq.s32.totalorder %s44, 0
      %p312 = por %p310, %p311
      %s314 = sadd.s32 %s313, 1
      %p317 = scmp.eq.s32.totalorder %s38, 1
      %p318 = scmp.ne.s32.totalorder %s313, %s315
      %p319 = scmp.eq.s32.totalorder %s38, 0
      %p320 = por %p318, %p319
      %p321 = scmp.ne.s32.totalorder %s313, %s315
      %p322 = scmp.eq.s32.totalorder %s43, 1
      %p323 = por %p321, %p322
      %p324 = scmp.ne.s32.totalorder %s315, %s316
      %p325 = scmp.eq.s32.totalorder %s43, 0
      %p326 = por %p324, %p325
      %p327 = scmp.ne.s32.totalorder %s315, %s316
      %p328 = scmp.eq.s32.totalorder %s44, 1
      %p329 = por %p327, %p328
      %p331 = scmp.ne.s32.totalorder %s316, %s330
      %p332 = scmp.eq.s32.totalorder %s44, 0
      %p333 = por %p331, %p332
      %s335 = sadd.s32 %s334, 1
      %p338 = scmp.eq.s32.totalorder %s38, 1
      %p339 = scmp.ne.s32.totalorder %s334, %s336
      %p340 = scmp.eq.s32.totalorder %s38, 0
      %p341 = por %p339, %p340
      %p342 = scmp.ne.s32.totalorder %s334, %s336
      %p343 = scmp.eq.s32.totalorder %s43, 1
      %p344 = por %p342, %p343
      %p345 = scmp.ne.s32.totalorder %s336, %s337
      %p346 = scmp.eq.s32.totalorder %s43, 0
      %p347 = por %p345, %p346
      %p348 = scmp.ne.s32.totalorder %s336, %s337
      %p349 = scmp.eq.s32.totalorder %s44, 1
      %p350 = por %p348, %p349
      %p352 = scmp.ne.s32.totalorder %s337, %s351
      %p353 = scmp.eq.s32.totalorder %s44, 0
      %p354 = por %p352, %p353
      %s356 = sadd.s32 %s355, 1
      %p359 = scmp.eq.s32.totalorder %s38, 1
      %p360 = scmp.ne.s32.totalorder %s355, %s357
      %p361 = scmp.eq.s32.totalorder %s38, 0
      %p362 = por %p360, %p361
      %p363 = scmp.ne.s32.totalorder %s355, %s357
      %p364 = scmp.eq.s32.totalorder %s43, 1
      %p365 = por %p363, %p364
      %p366 = scmp.ne.s32.totalorder %s357, %s358
      %p367 = scmp.eq.s32.totalorder %s43, 0
      %p368 = por %p366, %p367
      %p369 = scmp.ne.s32.totalorder %s357, %s358
      %p370 = scmp.eq.s32.totalorder %s44, 1
      %p371 = por %p369, %p370
      %p373 = scmp.ne.s32.totalorder %s358, %s372
      %p374 = scmp.eq.s32.totalorder %s44, 0
      %p375 = por %p373, %p374
      %s377 = sadd.s32 %s376, 1
      %p380 = scmp.eq.s32.totalorder %s38, 1
      %p381 = scmp.ne.s32.totalorder %s376, %s378
      %p382 = scmp.eq.s32.totalorder %s38, 0
      %p383 = por %p381, %p382
      %p384 = scmp.ne.s32.totalorder %s376, %s378
      %p385 = scmp.eq.s32.totalorder %s43, 1
      %p386 = por %p384, %p385
      %p387 = scmp.ne.s32.totalorder %s378, %s379
      %p388 = scmp.eq.s32.totalorder %s43, 0
      %p389 = por %p387, %p388
      %p390 = scmp.ne.s32.totalorder %s378, %s379
      %p391 = scmp.eq.s32.totalorder %s44, 1
      %p392 = por %p390, %p391
      %p394 = scmp.ne.s32.totalorder %s379, %s393
      %p395 = scmp.eq.s32.totalorder %s44, 0
      %p396 = por %p394, %p395
      %s397 = ssub.s32 %s38, %s45
      %p398 = scmp.eq.s32.totalorder %s397, 0
      %s400 = sadd.s32 %s399, 1
      %s401 = scalar_select %p398, %s399, %s400
      %p404 = pneg %p398
      %p405 = scmp.eq.s32.totalorder %s38, 1
      %p406 = por %p404, %p405
      %p407 = scmp.ne.s32.totalorder %s399, %s402
      %p408 = scmp.eq.s32.totalorder %s38, 0
      %p409 = por %p407, %p408
      %p410 = scmp.ne.s32.totalorder %s399, %s402
      %p411 = scmp.eq.s32.totalorder %s43, 1
      %p412 = por %p410, %p411
      %p413 = scmp.ne.s32.totalorder %s402, %s403
      %p414 = scmp.eq.s32.totalorder %s43, 0
      %p415 = por %p413, %p414
      %p416 = scmp.ne.s32.totalorder %s402, %s403
      %p417 = scmp.eq.s32.totalorder %s44, 1
      %p418 = por %p416, %p417
      %p420 = scmp.ne.s32.totalorder %s403, %s419
      %p421 = scmp.eq.s32.totalorder %s44, 0
      %p422 = por %p420, %p421
      %s423 = ssub.s32 %s38, %s45
      %p424 = scmp.eq.s32.totalorder %s423, 0
      %s426 = sadd.s32 %s425, 1
      %s427 = scalar_select %p424, %s425, %s426
      %p430 = pneg %p424
      %p431 = scmp.eq.s32.totalorder %s38, 1
      %p432 = por %p430, %p431
      %p433 = scmp.ne.s32.totalorder %s425, %s428
      %p434 = scmp.eq.s32.totalorder %s38, 0
      %p435 = por %p433, %p434
      %p436 = scmp.ne.s32.totalorder %s425, %s428
      %p437 = scmp.eq.s32.totalorder %s43, 1
      %p438 = por %p436, %p437
      %p439 = scmp.ne.s32.totalorder %s428, %s429
      %p440 = scmp.eq.s32.totalorder %s43, 0
      %p441 = por %p439, %p440
      %p442 = scmp.ne.s32.totalorder %s428, %s429
      %p443 = scmp.eq.s32.totalorder %s44, 1
      %p444 = por %p442, %p443
      %p446 = scmp.ne.s32.totalorder %s429, %s445
      %p447 = scmp.eq.s32.totalorder %s44, 0
      %p448 = por %p446, %p447
      %s449 = ssub.s32 %s38, %s45
      %p450 = scmp.eq.s32.totalorder %s449, 0
      %s452 = sadd.s32 %s451, 1
      %s453 = scalar_select %p450, %s451, %s452
      %p456 = pneg %p450
      %p457 = scmp.eq.s32.totalorder %s38, 1
      %p458 = por %p456, %p457
      %p459 = scmp.ne.s32.totalorder %s451, %s454
      %p460 = scmp.eq.s32.totalorder %s38, 0
      %p461 = por %p459, %p460
      %p462 = scmp.ne.s32.totalorder %s451, %s454
      %p463 = scmp.eq.s32.totalorder %s43, 1
      %p464 = por %p462, %p463
      %p465 = scmp.ne.s32.totalorder %s454, %s455
      %p466 = scmp.eq.s32.totalorder %s43, 0
      %p467 = por %p465, %p466
      %p468 = scmp.ne.s32.totalorder %s454, %s455
      %p469 = scmp.eq.s32.totalorder %s44, 1
      %p470 = por %p468, %p469
      %p472 = scmp.ne.s32.totalorder %s455, %s471
      %p473 = scmp.eq.s32.totalorder %s44, 0
      %p474 = por %p472, %p473
      %p475 = scmp.le.s32.totalorder 1, %s38
      %p476 = scmp.lt.s32.totalorder %s38, 3
      %p477 = pnand %p475, %p476
      %p478 = pneg %p477
      // Predicated region
      $region9: #{tpu_custom_call.1} parent=5 // pred_check
        _
      $region10: #{tpu_custom_call.1} parent=5 // pred_check_branch
        %480 = sbr.rel (%p477) target = $region12
      $region11: #{tpu_custom_call.1} parent=5 // pred_region
        %s481 = ssub.s32 %s38, 1
        // Predicated region
        $region13: #{tpu_custom_call.1} parent=11 // pred_check
          %p482 = pneg %p137
        $region14: #{tpu_custom_call.1} parent=11 // pred_check_branch
          %484 = sbr.rel (%p482) target = $region16
        $region15: #{tpu_custom_call.1} parent=11 // pred_region
          %s486 = ssub.s32 8192, 8192
          %487 = vsyncadd [#allocation6], %s486
          %s488 = sshll.u32 [#allocation5], 4
          %s489 = int_to_ptr.vmem [resolvable:$true] %s488
          %494 = dma.hbm_to_vmem [thread:$0]  %s3, 8192, %s489, [#allocation6], 256, 256, 16
        $region16: #{tpu_custom_call.1} parent=11 // pred_fallthru
          _
        // Predicated region
        $region17: #{tpu_custom_call.1} parent=11 // pred_check
          %p495 = pneg %p158
        $region18: #{tpu_custom_call.1} parent=11 // pred_check_branch
          %497 = sbr.rel (%p495) target = $region20
        $region19: #{tpu_custom_call.1} parent=11 // pred_region
          _
        $region20: #{tpu_custom_call.1} parent=11 // pred_fallthru
          _
        // Predicated region
        $region21: #{tpu_custom_call.1} parent=11 // pred_check
          %p498 = pneg %p179
        $region22: #{tpu_custom_call.1} parent=11 // pred_check_branch
          %500 = sbr.rel (%p498) target = $region24
        $region23: #{tpu_custom_call.1} parent=11 // pred_region
          %s502 = ssub.s32 4096, 4096
          %503 = vsyncadd [#allocation6], %s502
          %s504 = sshll.u32 [#allocation7], 4
          %s505 = int_to_ptr.vmem [resolvable:$true] %s504
          %510 = dma.hbm_to_vmem [thread:$0]  %s5, 4096, %s505, [#allocation6], 64, 64, 4
        $region24: #{tpu_custom_call.1} parent=11 // pred_fallthru
          _
        // Predicated region
        $region25: #{tpu_custom_call.1} parent=11 // pred_check
          %p511 = pneg %p200
        $region26: #{tpu_custom_call.1} parent=11 // pred_check_branch
          %513 = sbr.rel (%p511) target = $region28
        $region27: #{tpu_custom_call.1} parent=11 // pred_region
          _
        $region28: #{tpu_custom_call.1} parent=11 // pred_fallthru
          _
        // Predicated region
        $region29: #{tpu_custom_call.1} parent=11 // pred_check
          %p514 = pneg %p221
        $region30: #{tpu_custom_call.1} parent=11 // pred_check_branch
          %516 = sbr.rel (%p514) target = $region32
        $region31: #{tpu_custom_call.1} parent=11 // pred_region
          %s518 = ssub.s32 4096, 4096
          %519 = vsyncadd [#allocation9], %s518
          %s520 = sshll.u32 [#allocation8], 4
          %s521 = int_to_ptr.vmem [resolvable:$true] %s520
          %526 = dma.hbm_to_vmem [thread:$0]  %s7, 4096, %s521, [#allocation9], 256, 256, 16
        $region32: #{tpu_custom_call.1} parent=11 // pred_fallthru
          _
        // Predicated region
        $region33: #{tpu_custom_call.1} parent=11 // pred_check
          %p527 = pneg %p242
        $region34: #{tpu_custom_call.1} parent=11 // pred_check_branch
          %529 = sbr.rel (%p527) target = $region36
        $region35: #{tpu_custom_call.1} parent=11 // pred_region
          %s531 = ssub.s32 768, 768
          %532 = vsyncadd [#allocation9], %s531
          %s533 = sshll.u32 [#allocation10], 4
          %s534 = int_to_ptr.vmem [resolvable:$true] %s533
          %539 = dma.hbm_to_vmem [thread:$0]  %s8, 768, %s534, [#allocation9], 384, 384, 24
        $region36: #{tpu_custom_call.1} parent=11 // pred_fallthru
          _
        // Predicated region
        $region37: #{tpu_custom_call.1} parent=11 // pred_check
          %p540 = pneg %p263
        $region38: #{tpu_custom_call.1} parent=11 // pred_check_branch
          %542 = sbr.rel (%p540) target = $region40
        $region39: #{tpu_custom_call.1} parent=11 // pred_region
          _
        $region40: #{tpu_custom_call.1} parent=11 // pred_fallthru
          _
        // Predicated region
        $region41: #{tpu_custom_call.1} parent=11 // pred_check
          %p543 = pneg %p284
        $region42: #{tpu_custom_call.1} parent=11 // pred_check_branch
          %545 = sbr.rel (%p543) target = $region44
        $region43: #{tpu_custom_call.1} parent=11 // pred_region
          %s547 = ssub.s32 1024, 1024
          %548 = vsyncadd [#allocation12], %s547
          %s549 = sshll.u32 [#allocation11], 4
          %s550 = int_to_ptr.vmem [resolvable:$true] %s549
          %555 = dma.hbm_to_vmem [thread:$0]  %s10, 1024, %s550, [#allocation12], 64, 64, 4
        $region44: #{tpu_custom_call.1} parent=11 // pred_fallthru
          _
        // Predicated region
        $region45: #{tpu_custom_call.1} parent=11 // pred_check
          %p556 = pneg %p305
        $region46: #{tpu_custom_call.1} parent=11 // pred_check_branch
          %558 = sbr.rel (%p556) target = $region48
        $region47: #{tpu_custom_call.1} parent=11 // pred_region
          _
        $region48: #{tpu_custom_call.1} parent=11 // pred_fallthru
          _
        // Predicated region
        $region49: #{tpu_custom_call.1} parent=11 // pred_check
          %p559 = pneg %p326
        $region50: #{tpu_custom_call.1} parent=11 // pred_check_branch
          %561 = sbr.rel (%p559) target = $region52
        $region51: #{tpu_custom_call.1} parent=11 // pred_region
          %s563 = ssub.s32 4096, 4096
          %564 = vsyncadd [#allocation12], %s563
          %s565 = sshll.u32 [#allocation13], 4
          %s566 = int_to_ptr.vmem [resolvable:$true] %s565
          %571 = dma.hbm_to_vmem [thread:$0]  %s12, 4096, %s566, [#allocation12], 256, 256, 16
        $region52: #{tpu_custom_call.1} parent=11 // pred_fallthru
          _
        // Predicated region
        $region53: #{tpu_custom_call.1} parent=11 // pred_check
          %p572 = pneg %p347
        $region54: #{tpu_custom_call.1} parent=11 // pred_check_branch
          %574 = sbr.rel (%p572) target = $region56
        $region55: #{tpu_custom_call.1} parent=11 // pred_region
          _
        $region56: #{tpu_custom_call.1} parent=11 // pred_fallthru
          _
        // Predicated region
        $region57: #{tpu_custom_call.1} parent=11 // pred_check
          %p575 = pneg %p368
        $region58: #{tpu_custom_call.1} parent=11 // pred_check_branch
          %577 = sbr.rel (%p575) target = $region60
        $region59: #{tpu_custom_call.1} parent=11 // pred_region
          %s579 = ssub.s32 8192, 8192
          %580 = vsyncadd [#allocation15], %s579
          %s581 = sshll.u32 [#allocation14], 4
          %s582 = int_to_ptr.vmem [resolvable:$true] %s581
          %587 = dma.hbm_to_vmem [thread:$0]  %s14, 8192, %s582, [#allocation15], 128, 128, 8
        $region60: #{tpu_custom_call.1} parent=11 // pred_fallthru
          _
        // Predicated region
        $region61: #{tpu_custom_call.1} parent=11 // pred_check
          %p588 = pneg %p389
        $region62: #{tpu_custom_call.1} parent=11 // pred_check_branch
          %590 = sbr.rel (%p588) target = $region64
        $region63: #{tpu_custom_call.1} parent=11 // pred_region
          _
        $region64: #{tpu_custom_call.1} parent=11 // pred_fallthru
          _
      $region12: #{tpu_custom_call.1} parent=5 // pred_fallthru
        _
      %p591 = scmp.lt.s32.totalorder %s38, 2
      // Predicated region
      $region65: #{tpu_custom_call.1} parent=5 // pred_check
        %p592 = pneg %p591
      $region66: #{tpu_custom_call.1} parent=5 // pred_check_branch
        %594 = sbr.rel (%p592) target = $region68
      $region67: #{tpu_custom_call.1} parent=5 // pred_region
        // Predicated region
        $region69: #{tpu_custom_call.1} parent=67 // pred_check
          %p595 = pneg %p58
        $region70: #{tpu_custom_call.1} parent=67 // pred_check_branch
          %597 = sbr.rel (%p595) target = $region72
        $region71: #{tpu_custom_call.1} parent=67 // pred_region
          %p598 = scmp.lt.s32.totalorder %s38, 1
          %s599 = scalar_select %p598, %s38, 1
          %s600 = smul.addr %s599, 8
          %s601 = scalar_lea.vmem %s0, %s600
        $region72: #{tpu_custom_call.1} parent=67 // pred_fallthru
          _
        // Predicated region
        $region73: #{tpu_custom_call.1} parent=67 // pred_check
          %p602 = pneg %p84
        $region74: #{tpu_custom_call.1} parent=67 // pred_check_branch
          %604 = sbr.rel (%p602) target = $region76
        $region75: #{tpu_custom_call.1} parent=67 // pred_region
          %s605 = sand.u32 %s74, 1
          %s606 = scalar_lea.sflag [#allocation3], %s605
          %s607 = sand.u32 %s74, 1
          %s608 = smul.addr %s607, 16
          %s609 = scalar_lea.vmem [#allocation2], %s608
          %s611 = ssub.s32 256, 256
          %612 = vsyncadd %s606, %s611
          %s613 = smul.addr %s38, 2
          %s614 = smul.addr %s613, 128
          %s615 = scalar_lea.hbm %s1, %s614
          %s617 = sshll.u32 %s609, 4
          %s618 = int_to_ptr.vmem [resolvable:$true] %s617
          %620 = dma.hbm_to_vmem [thread:$0]  %s615, 256, %s618, %s606
        $region76: #{tpu_custom_call.1} parent=67 // pred_fallthru
          _
        // Predicated region
        $region77: #{tpu_custom_call.1} parent=67 // pred_check
          %p621 = pneg %p110
        $region78: #{tpu_custom_call.1} parent=67 // pred_check_branch
          %623 = sbr.rel (%p621) target = $region80
        $region79: #{tpu_custom_call.1} parent=67 // pred_region
          %p624 = scmp.lt.s32.totalorder %s38, 1
          %s625 = scalar_select %p624, %s38, 1
          %s626 = smul.addr %s625, 8
          %s627 = scalar_lea.vmem %s2, %s626
        $region80: #{tpu_custom_call.1} parent=67 // pred_fallthru
          _
      $region68: #{tpu_custom_call.1} parent=5 // pred_fallthru
        _
      %p628 = scmp.le.s32.totalorder 1, %s38
      %p629 = scmp.lt.s32.totalorder %s38, 3
      %p630 = pnand %p628, %p629
      %p631 = pneg %p630
      // Predicated region
      $region81: #{tpu_custom_call.1} parent=5 // pred_check
        _
      $region82: #{tpu_custom_call.1} parent=5 // pred_check_branch
        %633 = sbr.rel (%p630) target = $region84
      $region83: #{tpu_custom_call.1} parent=5 // pred_region
        %s634 = ssub.s32 %s38, 1
        %s635 = sand.u32 %s77, 1
        %s636 = scalar_lea.sflag [#allocation3], %s635
        %s637 = sand.u32 %s77, 1
        %s638 = smul.addr %s637, 16
        %s639 = scalar_lea.vmem [#allocation2], %s638
        // Predicated region
        $region85: #{tpu_custom_call.1} parent=83 // pred_check
          %p640 = pneg %p90
        $region86: #{tpu_custom_call.1} parent=83 // pred_check_branch
          %642 = sbr.rel (%p640) target = $region88
        $region87: #{tpu_custom_call.1} parent=83 // pred_region
          %643 = dma.done %s636, 256
        $region88: #{tpu_custom_call.1} parent=83 // pred_fallthru
          _
        // Predicated region
        $region89: #{tpu_custom_call.1} parent=83 // pred_check
          %p644 = pneg %p137
        $region90: #{tpu_custom_call.1} parent=83 // pred_check_branch
          %646 = sbr.rel (%p644) target = $region92
        $region91: #{tpu_custom_call.1} parent=83 // pred_region
          %647 = dma.done [#allocation6], 8192
        $region92: #{tpu_custom_call.1} parent=83 // pred_fallthru
          _
        // Predicated region
        $region93: #{tpu_custom_call.1} parent=83 // pred_check
          %p648 = pneg %p179
        $region94: #{tpu_custom_call.1} parent=83 // pred_check_branch
          %650 = sbr.rel (%p648) target = $region96
        $region95: #{tpu_custom_call.1} parent=83 // pred_region
          %651 = dma.done [#allocation6], 4096
        $region96: #{tpu_custom_call.1} parent=83 // pred_fallthru
          _
        // Predicated region
        $region97: #{tpu_custom_call.1} parent=83 // pred_check
          %p652 = pneg %p221
        $region98: #{tpu_custom_call.1} parent=83 // pred_check_branch
          %654 = sbr.rel (%p652) target = $region100
        $region99: #{tpu_custom_call.1} parent=83 // pred_region
          %655 = dma.done [#allocation9], 4096
        $region100: #{tpu_custom_call.1} parent=83 // pred_fallthru
          _
        // Predicated region
        $region101: #{tpu_custom_call.1} parent=83 // pred_check
          %p656 = pneg %p242
        $region102: #{tpu_custom_call.1} parent=83 // pred_check_branch
          %658 = sbr.rel (%p656) target = $region104
        $region103: #{tpu_custom_call.1} parent=83 // pred_region
          %659 = dma.done [#allocation9], 768
        $region104: #{tpu_custom_call.1} parent=83 // pred_fallthru
          _
        // Predicated region
        $region105: #{tpu_custom_call.1} parent=83 // pred_check
          %p660 = pneg %p284
        $region106: #{tpu_custom_call.1} parent=83 // pred_check_branch
          %662 = sbr.rel (%p660) target = $region108
        $region107: #{tpu_custom_call.1} parent=83 // pred_region
          %663 = dma.done [#allocation12], 1024
        $region108: #{tpu_custom_call.1} parent=83 // pred_fallthru
          _
        // Predicated region
        $region109: #{tpu_custom_call.1} parent=83 // pred_check
          %p664 = pneg %p326
        $region110: #{tpu_custom_call.1} parent=83 // pred_check_branch
          %666 = sbr.rel (%p664) target = $region112
        $region111: #{tpu_custom_call.1} parent=83 // pred_region
          %667 = dma.done [#allocation12], 4096
        $region112: #{tpu_custom_call.1} parent=83 // pred_fallthru
          _
        // Predicated region
        $region113: #{tpu_custom_call.1} parent=83 // pred_check
          %p668 = pneg %p368
        $region114: #{tpu_custom_call.1} parent=83 // pred_check_branch
          %670 = sbr.rel (%p668) target = $region116
        $region115: #{tpu_custom_call.1} parent=83 // pred_region
          %671 = dma.done [#allocation15], 8192
        $region116: #{tpu_custom_call.1} parent=83 // pred_fallthru
          _
        %p672 = scmp.lt.s32.totalorder %s43, 1
        %s673 = scalar_select %p672, %s43, 1
        %s674 = smul.addr %s673, 8
        %s675 = scalar_lea.vmem %s0, %s674
        %p676 = pneg %p64
        %p677 = pneg %p61
        %s678 = sand.u32 %s77, 1
        %s679 = scalar_lea.sflag [#allocation3], %s678
        %s680 = sand.u32 %s77, 1
        %s681 = smul.addr %s680, 16
        %s682 = scalar_lea.vmem [#allocation2], %s681
        %p683 = pneg %p90
        %p684 = pneg %p87
        %p685 = scmp.lt.s32.totalorder %s43, 1
        %s686 = scalar_select %p685, %s43, 1
        %s687 = smul.addr %s686, 8
        %s688 = scalar_lea.vmem %s2, %s687
        %p689 = pneg %p116
        %p690 = pneg %p113
        %p691 = pneg %p137
        %p692 = pneg %p134
        %p693 = pneg %p158
        %p694 = pneg %p155
        %p695 = pneg %p179
        %p696 = pneg %p176
        %p697 = pneg %p200
        %p698 = pneg %p197
        %p699 = pneg %p221
        %p700 = pneg %p218
        %p701 = pneg %p242
        %p702 = pneg %p239
        %p703 = pneg %p263
        %p704 = pneg %p260
        %p705 = pneg %p284
        %p706 = pneg %p281
        %p707 = pneg %p305
        %p708 = pneg %p302
        %p709 = pneg %p326
        %p710 = pneg %p323
        %p711 = pneg %p347
        %p712 = pneg %p344
        %p713 = pneg %p368
        %p714 = pneg %p365
        %p715 = pneg %p389
        %p716 = pneg %p386
        %p717 = pneg %p415
        %p718 = pneg %p412
        %s719 = sand.u32 %s402, 1
        %s720 = scalar_lea.sflag [#allocation4], %s719
        %s721 = sand.u32 %s402, 1
        %s722 = smul.addr %s721, 16
        %s723 = scalar_lea.vmem [#allocation16], %s722
        %p724 = pneg %p441
        %p725 = pneg %p438
        %s726 = sand.u32 %s43, 1
        %s727 = scalar_lea.sflag [#allocation18], %s726
        %s728 = sand.u32 %s428, 1
        %s729 = smul.addr %s728, 8
        %s730 = scalar_lea.vmem [#allocation17], %s729
        %p731 = pneg %p467
        %p732 = pneg %p464
        %s733 = sand.u32 %s43, 1
        %s734 = scalar_lea.sflag [#allocation18], %s733
        %s735 = sand.u32 %s454, 1
        %s736 = smul.addr %s735, 8
        %s737 = scalar_lea.vmem [#allocation19], %s736
        %p738 = scmp.lt.s32.totalorder %s43, 1
        %s739 = scalar_select %p738, %s43, 1
        %s740 = smul.addr %s739, 8
        %s741 = scalar_lea.vmem %s0, %s740
        %p742 = scmp.lt.s32.totalorder %s43, 1
        %s743 = scalar_select %p742, %s43, 1
        %s744 = smul.addr %s743, 8
        %s745 = scalar_lea.vmem %s2, %s744
        %v747 = vld [vmem:[%s639] sm:$0xff]
        %v748 = vld [vmem:[%s639 + $0x8] sm:$0xff]
        %v749 = vpack.c.bf16 %v747, %v747
        %v750 = vpack.c.bf16 %v748, %v748
        %v751 = vld [vmem:[#allocation5] sm:$0xff]
        %v752 = vld [vmem:[#allocation5 + $0x8] sm:$0xff]
        %v753 = vld [vmem:[#allocation5 + $0x10] sm:$0xff]
        %v754 = vld [vmem:[#allocation5 + $0x18] sm:$0xff]
        %v755 = vld [vmem:[#allocation5 + $0x20] sm:$0xff]
        %v756 = vld [vmem:[#allocation5 + $0x28] sm:$0xff]
        %v757 = vld [vmem:[#allocation5 + $0x30] sm:$0xff]
        %v758 = vld [vmem:[#allocation5 + $0x38] sm:$0xff]
        %v759 = vld [vmem:[#allocation5 + $0x40] sm:$0xff]
        %v760 = vld [vmem:[#allocation5 + $0x48] sm:$0xff]
        %v761 = vld [vmem:[#allocation5 + $0x50] sm:$0xff]
        %v762 = vld [vmem:[#allocation5 + $0x58] sm:$0xff]
        %v763 = vld [vmem:[#allocation5 + $0x60] sm:$0xff]
        %v764 = vld [vmem:[#allocation5 + $0x68] sm:$0xff]
        %v765 = vld [vmem:[#allocation5 + $0x70] sm:$0xff]
        %v766 = vld [vmem:[#allocation5 + $0x78] sm:$0xff]
        %v767 = vld [vmem:[#allocation5 + $0x80] sm:$0xff]
        %v768 = vld [vmem:[#allocation5 + $0x88] sm:$0xff]
        %v769 = vld [vmem:[#allocation5 + $0x90] sm:$0xff]
        %v770 = vld [vmem:[#allocation5 + $0x98] sm:$0xff]
        %v771 = vld [vmem:[#allocation5 + $0xa0] sm:$0xff]
        %v772 = vld [vmem:[#allocation5 + $0xa8] sm:$0xff]
        %v773 = vld [vmem:[#allocation5 + $0xb0] sm:$0xff]
        %v774 = vld [vmem:[#allocation5 + $0xb8] sm:$0xff]
        %v775 = vld [vmem:[#allocation5 + $0xc0] sm:$0xff]
        %v776 = vld [vmem:[#allocation5 + $0xc8] sm:$0xff]
        %v777 = vld [vmem:[#allocation5 + $0xd0] sm:$0xff]
        %v778 = vld [vmem:[#allocation5 + $0xd8] sm:$0xff]
        %v779 = vld [vmem:[#allocation5 + $0xe0] sm:$0xff]
        %v780 = vld [vmem:[#allocation5 + $0xe8] sm:$0xff]
        %v781 = vld [vmem:[#allocation5 + $0xf0] sm:$0xff]
        %v782 = vld [vmem:[#allocation5 + $0xf8] sm:$0xff]
        %v783 = vld [vmem:[#allocation5 + $0x100] sm:$0xff]
        %v784 = vld [vmem:[#allocation5 + $0x108] sm:$0xff]
        %v785 = vld [vmem:[#allocation5 + $0x110] sm:$0xff]
        %v786 = vld [vmem:[#allocation5 + $0x118] sm:$0xff]
        %v787 = vld [vmem:[#allocation5 + $0x120] sm:$0xff]
        %v788 = vld [vmem:[#allocation5 + $0x128] sm:$0xff]
        %v789 = vld [vmem:[#allocation5 + $0x130] sm:$0xff]
        %v790 = vld [vmem:[#allocation5 + $0x138] sm:$0xff]
        %v791 = vld [vmem:[#allocation5 + $0x140] sm:$0xff]
        %v792 = vld [vmem:[#allocation5 + $0x148] sm:$0xff]
        %v793 = vld [vmem:[#allocation5 + $0x150] sm:$0xff]
        %v794 = vld [vmem:[#allocation5 + $0x158] sm:$0xff]
        %v795 = vld [vmem:[#allocation5 + $0x160] sm:$0xff]
        %v796 = vld [vmem:[#allocation5 + $0x168] sm:$0xff]
        %v797 = vld [vmem:[#allocation5 + $0x170] sm:$0xff]
        %v798 = vld [vmem:[#allocation5 + $0x178] sm:$0xff]
        %v799 = vld [vmem:[#allocation5 + $0x180] sm:$0xff]
        %v800 = vld [vmem:[#allocation5 + $0x188] sm:$0xff]
        %v801 = vld [vmem:[#allocation5 + $0x190] sm:$0xff]
        %v802 = vld [vmem:[#allocation5 + $0x198] sm:$0xff]
        %v803 = vld [vmem:[#allocation5 + $0x1a0] sm:$0xff]
        %v804 = vld [vmem:[#allocation5 + $0x1a8] sm:$0xff]
        %v805 = vld [vmem:[#allocation5 + $0x1b0] sm:$0xff]
        %v806 = vld [vmem:[#allocation5 + $0x1b8] sm:$0xff]
        %v807 = vld [vmem:[#allocation5 + $0x1c0] sm:$0xff]
        %v808 = vld [vmem:[#allocation5 + $0x1c8] sm:$0xff]
        %v809 = vld [vmem:[#allocation5 + $0x1d0] sm:$0xff]
        %v810 = vld [vmem:[#allocation5 + $0x1d8] sm:$0xff]
        %v811 = vld [vmem:[#allocation5 + $0x1e0] sm:$0xff]
        %v812 = vld [vmem:[#allocation5 + $0x1e8] sm:$0xff]
        %v813 = vld [vmem:[#allocation5 + $0x1f0] sm:$0xff]
        %v814 = vld [vmem:[#allocation5 + $0x1f8] sm:$0xff]
        %v815 = vld [vmem:[%s4] sm:$0xf]
        %v817 = vlaneseq
        %v818 = vshrl.u32 %v817, 7
        %v819 = vsub.s32 0, %v818
        %v820 = vrot.slane %v815, %v819
        %v821 = vlaneseq
        %v822 = vshrl.u32 %v821, 7
        %v823 = vsub.s32 1, %v822
        %v824 = vrot.slane %v815, %v823
        %v825 = vlaneseq
        %v826 = vshrl.u32 %v825, 7
        %v827 = vsub.s32 2, %v826
        %v828 = vrot.slane %v815, %v827
        %v829 = vlaneseq
        %v830 = vshrl.u32 %v829, 7
        %v831 = vsub.s32 3, %v830
        %v832 = vrot.slane %v815, %v831
        %v901 = vunpack.c.l.b16 %v751
        %v902 = vunpack.c.h.b16 %v751
        %v903 = vunpack.c.l.b16 %v752
        %v904 = vunpack.c.h.b16 %v752
        %v905 = vunpack.c.l.b16 %v753
        %v906 = vunpack.c.h.b16 %v753
        %v907 = vunpack.c.l.b16 %v754
        %v908 = vunpack.c.h.b16 %v754
        %v909 = vunpack.c.l.b16 %v755
        %v910 = vunpack.c.h.b16 %v755
        %v911 = vunpack.c.l.b16 %v756
        %v912 = vunpack.c.h.b16 %v756
        %v913 = vunpack.c.l.b16 %v757
        %v914 = vunpack.c.h.b16 %v757
        %v915 = vunpack.c.l.b16 %v758
        %v916 = vunpack.c.h.b16 %v758
        %v917 = vunpack.c.l.b16 %v759
        %v918 = vunpack.c.h.b16 %v759
        %v919 = vunpack.c.l.b16 %v760
        %v920 = vunpack.c.h.b16 %v760
        %v921 = vunpack.c.l.b16 %v761
        %v922 = vunpack.c.h.b16 %v761
        %v923 = vunpack.c.l.b16 %v762
        %v924 = vunpack.c.h.b16 %v762
        %v925 = vunpack.c.l.b16 %v763
        %v926 = vunpack.c.h.b16 %v763
        %v927 = vunpack.c.l.b16 %v764
        %v928 = vunpack.c.h.b16 %v764
        %v929 = vunpack.c.l.b16 %v765
        %v930 = vunpack.c.h.b16 %v765
        %v931 = vunpack.c.l.b16 %v766
        %v932 = vunpack.c.h.b16 %v766
        %v933 = vunpack.c.l.b16 %v767
        %v934 = vunpack.c.h.b16 %v767
        %v935 = vunpack.c.l.b16 %v768
        %v936 = vunpack.c.h.b16 %v768
        %v937 = vunpack.c.l.b16 %v769
        %v938 = vunpack.c.h.b16 %v769
        %v939 = vunpack.c.l.b16 %v770
        %v940 = vunpack.c.h.b16 %v770
        %v941 = vunpack.c.l.b16 %v771
        %v942 = vunpack.c.h.b16 %v771
        %v943 = vunpack.c.l.b16 %v772
        %v944 = vunpack.c.h.b16 %v772
        %v945 = vunpack.c.l.b16 %v773
        %v946 = vunpack.c.h.b16 %v773
        %v947 = vunpack.c.l.b16 %v774
        %v948 = vunpack.c.h.b16 %v774
        %v949 = vunpack.c.l.b16 %v775
        %v950 = vunpack.c.h.b16 %v775
        %v951 = vunpack.c.l.b16 %v776
        %v952 = vunpack.c.h.b16 %v776
        %v953 = vunpack.c.l.b16 %v777
        %v954 = vunpack.c.h.b16 %v777
        %v955 = vunpack.c.l.b16 %v778
        %v956 = vunpack.c.h.b16 %v778
        %v957 = vunpack.c.l.b16 %v779
        %v958 = vunpack.c.h.b16 %v779
        %v959 = vunpack.c.l.b16 %v780
        %v960 = vunpack.c.h.b16 %v780
        %v961 = vunpack.c.l.b16 %v781
        %v962 = vunpack.c.h.b16 %v781
        %v963 = vunpack.c.l.b16 %v782
        %v964 = vunpack.c.h.b16 %v782
        %v965 = vunpack.c.l.b16 %v783
        %v966 = vunpack.c.h.b16 %v783
        %v967 = vunpack.c.l.b16 %v784
        %v968 = vunpack.c.h.b16 %v784
        %v969 = vunpack.c.l.b16 %v785
        %v970 = vunpack.c.h.b16 %v785
        %v971 = vunpack.c.l.b16 %v786
        %v972 = vunpack.c.h.b16 %v786
        %v973 = vunpack.c.l.b16 %v787
        %v974 = vunpack.c.h.b16 %v787
        %v975 = vunpack.c.l.b16 %v788
        %v976 = vunpack.c.h.b16 %v788
        %v977 = vunpack.c.l.b16 %v789
        %v978 = vunpack.c.h.b16 %v789
        %v979 = vunpack.c.l.b16 %v790
        %v980 = vunpack.c.h.b16 %v790
        %v981 = vunpack.c.l.b16 %v791
        %v982 = vunpack.c.h.b16 %v791
        %v983 = vunpack.c.l.b16 %v792
        %v984 = vunpack.c.h.b16 %v792
        %v985 = vunpack.c.l.b16 %v793
        %v986 = vunpack.c.h.b16 %v793
        %v987 = vunpack.c.l.b16 %v794
        %v988 = vunpack.c.h.b16 %v794
        %v989 = vunpack.c.l.b16 %v795
        %v990 = vunpack.c.h.b16 %v795
        %v991 = vunpack.c.l.b16 %v796
        %v992 = vunpack.c.h.b16 %v796
        %v993 = vunpack.c.l.b16 %v797
        %v994 = vunpack.c.h.b16 %v797
        %v995 = vunpack.c.l.b16 %v798
        %v996 = vunpack.c.h.b16 %v798
        %v997 = vunpack.c.l.b16 %v799
        %v998 = vunpack.c.h.b16 %v799
        %v999 = vunpack.c.l.b16 %v800
        %v1000 = vunpack.c.h.b16 %v800
        %v1001 = vunpack.c.l.b16 %v801
        %v1002 = vunpack.c.h.b16 %v801
        %v1003 = vunpack.c.l.b16 %v802
        %v1004 = vunpack.c.h.b16 %v802
        %v1005 = vunpack.c.l.b16 %v803
        %v1006 = vunpack.c.h.b16 %v803
        %v1007 = vunpack.c.l.b16 %v804
        %v1008 = vunpack.c.h.b16 %v804
        %v1009 = vunpack.c.l.b16 %v805
        %v1010 = vunpack.c.h.b16 %v805
        %v1011 = vunpack.c.l.b16 %v806
        %v1012 = vunpack.c.h.b16 %v806
        %v1013 = vunpack.c.l.b16 %v807
        %v1014 = vunpack.c.h.b16 %v807
        %v1015 = vunpack.c.l.b16 %v808
        %v1016 = vunpack.c.h.b16 %v808
        %v1017 = vunpack.c.l.b16 %v809
        %v1018 = vunpack.c.h.b16 %v809
        %v1019 = vunpack.c.l.b16 %v810
        %v1020 = vunpack.c.h.b16 %v810
        %v1021 = vunpack.c.l.b16 %v811
        %v1022 = vunpack.c.h.b16 %v811
        %v1023 = vunpack.c.l.b16 %v812
        %v1024 = vunpack.c.h.b16 %v812
        %v1025 = vunpack.c.l.b16 %v813
        %v1026 = vunpack.c.h.b16 %v813
        %v1027 = vunpack.c.l.b16 %v814
        %v1028 = vunpack.c.h.b16 %v814
        %v1029 = vpack.c.b16 %v905, %v901
        %v1030 = vpack.c.b16 %v906, %v902
        %v1031 = vpack.c.b16 %v907, %v903
        %v1032 = vpack.c.b16 %v908, %v904
        %v1033 = vpack.c.b16 %v913, %v909
        %v1034 = vpack.c.b16 %v914, %v910
        %v1035 = vpack.c.b16 %v915, %v911
        %v1036 = vpack.c.b16 %v916, %v912
        %v1037 = vpack.c.b16 %v921, %v917
        %v1038 = vpack.c.b16 %v922, %v918
        %v1039 = vpack.c.b16 %v923, %v919
        %v1040 = vpack.c.b16 %v924, %v920
        %v1041 = vpack.c.b16 %v929, %v925
        %v1042 = vpack.c.b16 %v930, %v926
        %v1043 = vpack.c.b16 %v931, %v927
        %v1044 = vpack.c.b16 %v932, %v928
        %v1045 = vpack.c.b16 %v937, %v933
        %v1046 = vpack.c.b16 %v938, %v934
        %v1047 = vpack.c.b16 %v939, %v935
        %v1048 = vpack.c.b16 %v940, %v936
        %v1049 = vpack.c.b16 %v945, %v941
        %v1050 = vpack.c.b16 %v946, %v942
        %v1051 = vpack.c.b16 %v947, %v943
        %v1052 = vpack.c.b16 %v948, %v944
        %v1053 = vpack.c.b16 %v953, %v949
        %v1054 = vpack.c.b16 %v954, %v950
        %v1055 = vpack.c.b16 %v955, %v951
        %v1056 = vpack.c.b16 %v956, %v952
        %v1057 = vpack.c.b16 %v961, %v957
        %v1058 = vpack.c.b16 %v962, %v958
        %v1059 = vpack.c.b16 %v963, %v959
        %v1060 = vpack.c.b16 %v964, %v960
        %v1061 = vpack.c.b16 %v969, %v965
        %v1062 = vpack.c.b16 %v970, %v966
        %v1063 = vpack.c.b16 %v971, %v967
        %v1064 = vpack.c.b16 %v972, %v968
        %v1065 = vpack.c.b16 %v977, %v973
        %v1066 = vpack.c.b16 %v978, %v974
        %v1067 = vpack.c.b16 %v979, %v975
        %v1068 = vpack.c.b16 %v980, %v976
        %v1069 = vpack.c.b16 %v985, %v981
        %v1070 = vpack.c.b16 %v986, %v982
        %v1071 = vpack.c.b16 %v987, %v983
        %v1072 = vpack.c.b16 %v988, %v984
        %v1073 = vpack.c.b16 %v993, %v989
        %v1074 = vpack.c.b16 %v994, %v990
        %v1075 = vpack.c.b16 %v995, %v991
        %v1076 = vpack.c.b16 %v996, %v992
        %v1077 = vpack.c.b16 %v1001, %v997
        %v1078 = vpack.c.b16 %v1002, %v998
        %v1079 = vpack.c.b16 %v1003, %v999
        %v1080 = vpack.c.b16 %v1004, %v1000
        %v1081 = vpack.c.b16 %v1009, %v1005
        %v1082 = vpack.c.b16 %v1010, %v1006
        %v1083 = vpack.c.b16 %v1011, %v1007
        %v1084 = vpack.c.b16 %v1012, %v1008
        %v1085 = vpack.c.b16 %v1017, %v1013
        %v1086 = vpack.c.b16 %v1018, %v1014
        %v1087 = vpack.c.b16 %v1019, %v1015
        %v1088 = vpack.c.b16 %v1020, %v1016
        %v1089 = vpack.c.b16 %v1025, %v1021
        %v1090 = vpack.c.b16 %v1026, %v1022
        %v1091 = vpack.c.b16 %v1027, %v1023
        %v1092 = vpack.c.b16 %v1028, %v1024
        %1157 = vmatprep.subr.bf16.mxu0 %v1058
        %1158 = vmatpush1.bf16.msra.mxu0 %v1057
        %1159 = vmatprep.subr.bf16.mxu0 %v1054
        %1160 = vmatpush1.bf16.msra.mxu0 %v1053
        %1161 = vmatprep.subr.bf16.mxu0 %v1050
        %1162 = vmatpush1.bf16.msra.mxu0 %v1049
        %1163 = vmatprep.subr.bf16.mxu0 %v1046
        %1164 = vmatpush1.bf16.msra.mxu0 %v1045
        %1165 = vmatprep.subr.bf16.mxu0 %v1042
        %1166 = vmatpush1.bf16.msra.mxu0 %v1041
        %1167 = vmatprep.subr.bf16.mxu0 %v1038
        %1168 = vmatpush1.bf16.msra.mxu0 %v1037
        %1169 = vmatprep.subr.bf16.mxu0 %v1034
        %1170 = vmatpush1.bf16.msra.mxu0 %v1033
        %1171 = vmatprep.subr.bf16.mxu0 %v1030
        %1172 = vmatpush1.bf16.msra.mxu0 %v1029
        %1173 = vmatprep.subr.bf16.mxu0 %v1090
        %1174 = vmatpush2.bf16.msra.mxu0 %v1089
        %1175 = vmatprep.subr.bf16.mxu0 %v1086
        %1176 = vmatpush2.bf16.msra.mxu0 %v1085
        %1177 = vmatprep.subr.bf16.mxu0 %v1082
        %1178 = vmatpush2.bf16.msra.mxu0 %v1081
        %1179 = vmatprep.subr.bf16.mxu0 %v1078
        %1180 = vmatpush2.bf16.msra.mxu0 %v1077
        %1181 = vmatprep.subr.bf16.mxu0 %v1074
        %1182 = vmatpush2.bf16.msra.mxu0 %v1073
        %1183 = vmatprep.subr.bf16.mxu0 %v1070
        %1184 = vmatpush2.bf16.msra.mxu0 %v1069
        %1185 = vmatprep.subr.bf16.mxu0 %v1066
        %1186 = vmatpush2.bf16.msra.mxu0 %v1065
        %1187 = vmatprep.subr.bf16.mxu0 %v1062
        %1188 = vmatpush2.bf16.msra.mxu0 %v1061
        %1189 = vmatprep.mubr.bf16.mxu0 %v750
        %1190 = vmatmul.mubr.bf16.gmra.mxu0 %v749
        %v1191 = vpop.f32.mrf.mxu0
        %v1192 = vadd.f32 %v820, %v1191
        %v1193 = vpop.f32.mrf.mxu0
        %v1194 = vadd.f32 %v824, %v1193
        %v1195 = vpop.f32.mrf.mxu0
        %v1196 = vpop.f32.mrf.mxu0
        %1197 = vdwg.mxu0
        %1198 = vmatprep.subr.bf16.mxu0 %v1060
        %1199 = vmatpush1.bf16.msra.mxu0 %v1059
        %1200 = vmatprep.subr.bf16.mxu0 %v1056
        %1201 = vmatpush1.bf16.msra.mxu0 %v1055
        %1202 = vmatprep.subr.bf16.mxu0 %v1052
        %1203 = vmatpush1.bf16.msra.mxu0 %v1051
        %1204 = vmatprep.subr.bf16.mxu0 %v1048
        %1205 = vmatpush1.bf16.msra.mxu0 %v1047
        %1206 = vmatprep.subr.bf16.mxu0 %v1044
        %1207 = vmatpush1.bf16.msra.mxu0 %v1043
        %1208 = vmatprep.subr.bf16.mxu0 %v1040
        %1209 = vmatpush1.bf16.msra.mxu0 %v1039
        %1210 = vmatprep.subr.bf16.mxu0 %v1036
        %1211 = vmatpush1.bf16.msra.mxu0 %v1035
        %1212 = vmatprep.subr.bf16.mxu0 %v1032
        %1213 = vmatpush1.bf16.msra.mxu0 %v1031
        %1214 = vmatprep.subr.bf16.mxu0 %v1092
        %1215 = vmatpush2.bf16.msra.mxu0 %v1091
        %1216 = vmatprep.subr.bf16.mxu0 %v1088
        %1217 = vmatpush2.bf16.msra.mxu0 %v1087
        %1218 = vmatprep.subr.bf16.mxu0 %v1084
        %1219 = vmatpush2.bf16.msra.mxu0 %v1083
        %1220 = vmatprep.subr.bf16.mxu0 %v1080
        %1221 = vmatpush2.bf16.msra.mxu0 %v1079
        %1222 = vmatprep.subr.bf16.mxu0 %v1076
        %1223 = vmatpush2.bf16.msra.mxu0 %v1075
        %1224 = vmatprep.subr.bf16.mxu0 %v1072
        %1225 = vmatpush2.bf16.msra.mxu0 %v1071
        %1226 = vmatprep.subr.bf16.mxu0 %v1068
        %1227 = vmatpush2.bf16.msra.mxu0 %v1067
        %1228 = vmatprep.subr.bf16.mxu0 %v1064
        %1229 = vmatpush2.bf16.msra.mxu0 %v1063
        %1230 = vmatprep.mubr.bf16.mxu0 %v750
        %1231 = vmatmul.mubr.bf16.gmra.mxu0 %v749
        %v1232 = vpop.f32.mrf.mxu0
        %v1233 = vadd.f32 %v828, %v1232
        %v1234 = vpop.f32.mrf.mxu0
        %v1235 = vadd.f32 %v832, %v1234
        %v1236 = vpop.f32.mrf.mxu0
        %v1237 = vpop.f32.mrf.mxu0
        %1238 = vdwg.mxu0
        %v1239 = vmax.f32 %v1192, 0.0
        %v1240 = vmax.f32 %v1194, 0.0
        %v1241 = vmax.f32 %v1233, 0.0
        %v1242 = vmax.f32 %v1235, 0.0
        %v1243 = vpack.c.bf16 %v1239, %v1239
        %v1244 = vpack.c.bf16 %v1240, %v1240
        %v1245 = vpack.c.bf16 %v1241, %v1241
        %v1246 = vpack.c.bf16 %v1242, %v1242
        %v1247 = vld [vmem:[#allocation7] sm:$0xf]
        %v1248 = vld [vmem:[#allocation7 + $0x4] sm:$0xf]
        %v1249 = vld [vmem:[#allocation7 + $0x8] sm:$0xf]
        %v1250 = vld [vmem:[#allocation7 + $0xc] sm:$0xf]
        %v1251 = vld [vmem:[#allocation7 + $0x10] sm:$0xf]
        %v1252 = vld [vmem:[#allocation7 + $0x14] sm:$0xf]
        %v1253 = vld [vmem:[#allocation7 + $0x18] sm:$0xf]
        %v1254 = vld [vmem:[#allocation7 + $0x1c] sm:$0xf]
        %v1255 = vld [vmem:[#allocation7 + $0x20] sm:$0xf]
        %v1256 = vld [vmem:[#allocation7 + $0x24] sm:$0xf]
        %v1257 = vld [vmem:[#allocation7 + $0x28] sm:$0xf]
        %v1258 = vld [vmem:[#allocation7 + $0x2c] sm:$0xf]
        %v1259 = vld [vmem:[#allocation7 + $0x30] sm:$0xf]
        %v1260 = vld [vmem:[#allocation7 + $0x34] sm:$0xf]
        %v1261 = vld [vmem:[#allocation7 + $0x38] sm:$0xf]
        %v1262 = vld [vmem:[#allocation7 + $0x3c] sm:$0xf]
        %v1263 = vld [vmem:[#allocation7 + $0x40] sm:$0xf]
        %v1264 = vld [vmem:[#allocation7 + $0x44] sm:$0xf]
        %v1265 = vld [vmem:[#allocation7 + $0x48] sm:$0xf]
        %v1266 = vld [vmem:[#allocation7 + $0x4c] sm:$0xf]
        %v1267 = vld [vmem:[#allocation7 + $0x50] sm:$0xf]
        %v1268 = vld [vmem:[#allocation7 + $0x54] sm:$0xf]
        %v1269 = vld [vmem:[#allocation7 + $0x58] sm:$0xf]
        %v1270 = vld [vmem:[#allocation7 + $0x5c] sm:$0xf]
        %v1271 = vld [vmem:[#allocation7 + $0x60] sm:$0xf]
        %v1272 = vld [vmem:[#allocation7 + $0x64] sm:$0xf]
        %v1273 = vld [vmem:[#allocation7 + $0x68] sm:$0xf]
        %v1274 = vld [vmem:[#allocation7 + $0x6c] sm:$0xf]
        %v1275 = vld [vmem:[#allocation7 + $0x70] sm:$0xf]
        %v1276 = vld [vmem:[#allocation7 + $0x74] sm:$0xf]
        %v1277 = vld [vmem:[#allocation7 + $0x78] sm:$0xf]
        %v1278 = vld [vmem:[#allocation7 + $0x7c] sm:$0xf]
        %v1279 = vld [vmem:[#allocation7 + $0x80] sm:$0xf]
        %v1280 = vld [vmem:[#allocation7 + $0x84] sm:$0xf]
        %v1281 = vld [vmem:[#allocation7 + $0x88] sm:$0xf]
        %v1282 = vld [vmem:[#allocation7 + $0x8c] sm:$0xf]
        %v1283 = vld [vmem:[#allocation7 + $0x90] sm:$0xf]
        %v1284 = vld [vmem:[#allocation7 + $0x94] sm:$0xf]
        %v1285 = vld [vmem:[#allocation7 + $0x98] sm:$0xf]
        %v1286 = vld [vmem:[#allocation7 + $0x9c] sm:$0xf]
        %v1287 = vld [vmem:[#allocation7 + $0xa0] sm:$0xf]
        %v1288 = vld [vmem:[#allocation7 + $0xa4] sm:$0xf]
        %v1289 = vld [vmem:[#allocation7 + $0xa8] sm:$0xf]
        %v1290 = vld [vmem:[#allocation7 + $0xac] sm:$0xf]
        %v1291 = vld [vmem:[#allocation7 + $0xb0] sm:$0xf]
        %v1292 = vld [vmem:[#allocation7 + $0xb4] sm:$0xf]
        %v1293 = vld [vmem:[#allocation7 + $0xb8] sm:$0xf]
        %v1294 = vld [vmem:[#allocation7 + $0xbc] sm:$0xf]
        %v1295 = vld [vmem:[#allocation7 + $0xc0] sm:$0xf]
        %v1296 = vld [vmem:[#allocation7 + $0xc4] sm:$0xf]
        %v1297 = vld [vmem:[#allocation7 + $0xc8] sm:$0xf]
        %v1298 = vld [vmem:[#allocation7 + $0xcc] sm:$0xf]
        %v1299 = vld [vmem:[#allocation7 + $0xd0] sm:$0xf]
        %v1300 = vld [vmem:[#allocation7 + $0xd4] sm:$0xf]
        %v1301 = vld [vmem:[#allocation7 + $0xd8] sm:$0xf]
        %v1302 = vld [vmem:[#allocation7 + $0xdc] sm:$0xf]
        %v1303 = vld [vmem:[#allocation7 + $0xe0] sm:$0xf]
        %v1304 = vld [vmem:[#allocation7 + $0xe4] sm:$0xf]
        %v1305 = vld [vmem:[#allocation7 + $0xe8] sm:$0xf]
        %v1306 = vld [vmem:[#allocation7 + $0xec] sm:$0xf]
        %v1307 = vld [vmem:[#allocation7 + $0xf0] sm:$0xf]
        %v1308 = vld [vmem:[#allocation7 + $0xf4] sm:$0xf]
        %v1309 = vld [vmem:[#allocation7 + $0xf8] sm:$0xf]
        %v1310 = vld [vmem:[#allocation7 + $0xfc] sm:$0xf]
        %v1311 = vld [vmem:[%s6] sm:$0x1]
        %v1313 = vlaneseq
        %v1314 = vshrl.u32 %v1313, 7
        %v1315 = vsub.s32 0, %v1314
        %v1316 = vrot.slane %v1311, %v1315
        %v1382 = vunpack.c.l.b16 %v1247
        %v1383 = vunpack.c.l.b16 %v1248
        %v1384 = vunpack.c.l.b16 %v1249
        %v1385 = vunpack.c.l.b16 %v1250
        %v1386 = vunpack.c.l.b16 %v1251
        %v1387 = vunpack.c.l.b16 %v1252
        %v1388 = vunpack.c.l.b16 %v1253
        %v1389 = vunpack.c.l.b16 %v1254
        %v1390 = vunpack.c.l.b16 %v1255
        %v1391 = vunpack.c.l.b16 %v1256
        %v1392 = vunpack.c.l.b16 %v1257
        %v1393 = vunpack.c.l.b16 %v1258
        %v1394 = vunpack.c.l.b16 %v1259
        %v1395 = vunpack.c.l.b16 %v1260
        %v1396 = vunpack.c.l.b16 %v1261
        %v1397 = vunpack.c.l.b16 %v1262
        %v1398 = vunpack.c.l.b16 %v1263
        %v1399 = vunpack.c.l.b16 %v1264
        %v1400 = vunpack.c.l.b16 %v1265
        %v1401 = vunpack.c.l.b16 %v1266
        %v1402 = vunpack.c.l.b16 %v1267
        %v1403 = vunpack.c.l.b16 %v1268
        %v1404 = vunpack.c.l.b16 %v1269
        %v1405 = vunpack.c.l.b16 %v1270
        %v1406 = vunpack.c.l.b16 %v1271
        %v1407 = vunpack.c.l.b16 %v1272
        %v1408 = vunpack.c.l.b16 %v1273
        %v1409 = vunpack.c.l.b16 %v1274
        %v1410 = vunpack.c.l.b16 %v1275
        %v1411 = vunpack.c.l.b16 %v1276
        %v1412 = vunpack.c.l.b16 %v1277
        %v1413 = vunpack.c.l.b16 %v1278
        %v1414 = vunpack.c.l.b16 %v1279
        %v1415 = vunpack.c.l.b16 %v1280
        %v1416 = vunpack.c.l.b16 %v1281
        %v1417 = vunpack.c.l.b16 %v1282
        %v1418 = vunpack.c.l.b16 %v1283
        %v1419 = vunpack.c.l.b16 %v1284
        %v1420 = vunpack.c.l.b16 %v1285
        %v1421 = vunpack.c.l.b16 %v1286
        %v1422 = vunpack.c.l.b16 %v1287
        %v1423 = vunpack.c.l.b16 %v1288
        %v1424 = vunpack.c.l.b16 %v1289
        %v1425 = vunpack.c.l.b16 %v1290
        %v1426 = vunpack.c.l.b16 %v1291
        %v1427 = vunpack.c.l.b16 %v1292
        %v1428 = vunpack.c.l.b16 %v1293
        %v1429 = vunpack.c.l.b16 %v1294
        %v1430 = vunpack.c.l.b16 %v1295
        %v1431 = vunpack.c.l.b16 %v1296
        %v1432 = vunpack.c.l.b16 %v1297
        %v1433 = vunpack.c.l.b16 %v1298
        %v1434 = vunpack.c.l.b16 %v1299
        %v1435 = vunpack.c.l.b16 %v1300
        %v1436 = vunpack.c.l.b16 %v1301
        %v1437 = vunpack.c.l.b16 %v1302
        %v1438 = vunpack.c.l.b16 %v1303
        %v1439 = vunpack.c.l.b16 %v1304
        %v1440 = vunpack.c.l.b16 %v1305
        %v1441 = vunpack.c.l.b16 %v1306
        %v1442 = vunpack.c.l.b16 %v1307
        %v1443 = vunpack.c.l.b16 %v1308
        %v1444 = vunpack.c.l.b16 %v1309
        %v1445 = vunpack.c.l.b16 %v1310
        %v1446 = vpack.c.b16 %v1383, %v1382
        %v1447 = vpack.c.b16 %v1385, %v1384
        %v1448 = vpack.c.b16 %v1387, %v1386
        %v1449 = vpack.c.b16 %v1389, %v1388
        %v1450 = vpack.c.b16 %v1391, %v1390
        %v1451 = vpack.c.b16 %v1393, %v1392
        %v1452 = vpack.c.b16 %v1395, %v1394
        %v1453 = vpack.c.b16 %v1397, %v1396
        %v1454 = vpack.c.b16 %v1399, %v1398
        %v1455 = vpack.c.b16 %v1401, %v1400
        %v1456 = vpack.c.b16 %v1403, %v1402
        %v1457 = vpack.c.b16 %v1405, %v1404
        %v1458 = vpack.c.b16 %v1407, %v1406
        %v1459 = vpack.c.b16 %v1409, %v1408
        %v1460 = vpack.c.b16 %v1411, %v1410
        %v1461 = vpack.c.b16 %v1413, %v1412
        %v1462 = vpack.c.b16 %v1415, %v1414
        %v1463 = vpack.c.b16 %v1417, %v1416
        %v1464 = vpack.c.b16 %v1419, %v1418
        %v1465 = vpack.c.b16 %v1421, %v1420
        %v1466 = vpack.c.b16 %v1423, %v1422
        %v1467 = vpack.c.b16 %v1425, %v1424
        %v1468 = vpack.c.b16 %v1427, %v1426
        %v1469 = vpack.c.b16 %v1429, %v1428
        %v1470 = vpack.c.b16 %v1431, %v1430
        %v1471 = vpack.c.b16 %v1433, %v1432
        %v1472 = vpack.c.b16 %v1435, %v1434
        %v1473 = vpack.c.b16 %v1437, %v1436
        %v1474 = vpack.c.b16 %v1439, %v1438
        %v1475 = vpack.c.b16 %v1441, %v1440
        %v1476 = vpack.c.b16 %v1443, %v1442
        %v1477 = vpack.c.b16 %v1445, %v1444
        %1510 = vmatprep.subr.bf16.mxu0 0
        %1511 = vmatpush1.bf16.msra.mxu0 %v1453
        %1512 = vmatprep.subr.bf16.mxu0 0
        %1513 = vmatpush1.bf16.msra.mxu0 %v1452
        %1514 = vmatprep.subr.bf16.mxu0 0
        %1515 = vmatpush1.bf16.msra.mxu0 %v1451
        %1516 = vmatprep.subr.bf16.mxu0 0
        %1517 = vmatpush1.bf16.msra.mxu0 %v1450
        %1518 = vmatprep.subr.bf16.mxu0 0
        %1519 = vmatpush1.bf16.msra.mxu0 %v1449
        %1520 = vmatprep.subr.bf16.mxu0 0
        %1521 = vmatpush1.bf16.msra.mxu0 %v1448
        %1522 = vmatprep.subr.bf16.mxu0 0
        %1523 = vmatpush1.bf16.msra.mxu0 %v1447
        %1524 = vmatprep.subr.bf16.mxu0 0
        %1525 = vmatpush1.bf16.msra.mxu0 %v1446
        %1526 = vmatprep.subr.bf16.mxu0 0
        %1527 = vmatpush2.bf16.msra.mxu0 %v1461
        %1528 = vmatprep.subr.bf16.mxu0 0
        %1529 = vmatpush2.bf16.msra.mxu0 %v1460
        %1530 = vmatprep.subr.bf16.mxu0 0
        %1531 = vmatpush2.bf16.msra.mxu0 %v1459
        %1532 = vmatprep.subr.bf16.mxu0 0
        %1533 = vmatpush2.bf16.msra.mxu0 %v1458
        %1534 = vmatprep.subr.bf16.mxu0 0
        %1535 = vmatpush2.bf16.msra.mxu0 %v1457
        %1536 = vmatprep.subr.bf16.mxu0 0
        %1537 = vmatpush2.bf16.msra.mxu0 %v1456
        %1538 = vmatprep.subr.bf16.mxu0 0
        %1539 = vmatpush2.bf16.msra.mxu0 %v1455
        %1540 = vmatprep.subr.bf16.mxu0 0
        %1541 = vmatpush2.bf16.msra.mxu0 %v1454
        %1542 = vmatprep.mubr.bf16.mxu0 %v1244
        %1543 = vmatmul.mubr.bf16.gmra.mxu0 %v1243
        %v1544 = vpop.f32.mrf.mxu0
        %v1545 = vadd.f32 %v1316, %v1544
        %v1546 = vpop.f32.mrf.mxu0
        %v1547 = vpop.f32.mrf.mxu0
        %v1548 = vpop.f32.mrf.mxu0
        %1549 = vdwg.mxu0
        %1550 = vmatprep.subr.bf16.mxu0 0
        %1551 = vmatpush1.bf16.msra.mxu0 %v1469
        %1552 = vmatprep.subr.bf16.mxu0 0
        %1553 = vmatpush1.bf16.msra.mxu0 %v1468
        %1554 = vmatprep.subr.bf16.mxu0 0
        %1555 = vmatpush1.bf16.msra.mxu0 %v1467
        %1556 = vmatprep.subr.bf16.mxu0 0
        %1557 = vmatpush1.bf16.msra.mxu0 %v1466
        %1558 = vmatprep.subr.bf16.mxu0 0
        %1559 = vmatpush1.bf16.msra.mxu0 %v1465
        %1560 = vmatprep.subr.bf16.mxu0 0
        %1561 = vmatpush1.bf16.msra.mxu0 %v1464
        %1562 = vmatprep.subr.bf16.mxu0 0
        %1563 = vmatpush1.bf16.msra.mxu0 %v1463
        %1564 = vmatprep.subr.bf16.mxu0 0
        %1565 = vmatpush1.bf16.msra.mxu0 %v1462
        %1566 = vmatprep.subr.bf16.mxu0 0
        %1567 = vmatpush2.bf16.msra.mxu0 %v1477
        %1568 = vmatprep.subr.bf16.mxu0 0
        %1569 = vmatpush2.bf16.msra.mxu0 %v1476
        %1570 = vmatprep.subr.bf16.mxu0 0
        %1571 = vmatpush2.bf16.msra.mxu0 %v1475
        %1572 = vmatprep.subr.bf16.mxu0 0
        %1573 = vmatpush2.bf16.msra.mxu0 %v1474
        %1574 = vmatprep.subr.bf16.mxu0 0
        %1575 = vmatpush2.bf16.msra.mxu0 %v1473
        %1576 = vmatprep.subr.bf16.mxu0 0
        %1577 = vmatpush2.bf16.msra.mxu0 %v1472
        %1578 = vmatprep.subr.bf16.mxu0 0
        %1579 = vmatpush2.bf16.msra.mxu0 %v1471
        %1580 = vmatprep.subr.bf16.mxu0 0
        %1581 = vmatpush2.bf16.msra.mxu0 %v1470
        %1582 = vmatprep.mubr.bf16.mxu0 %v1246
        %1583 = vmatmul.mubr.bf16.gmra.mxu0 %v1245
        %v1584 = vpop.f32.mrf.mxu0
        %v1585 = vadd.f32 %v1545, %v1584
        %v1586 = vpop.f32.mrf.mxu0
        %v1587 = vpop.f32.mrf.mxu0
        %v1588 = vpop.f32.mrf.mxu0
        %1589 = vdwg.mxu0
        %v1590 = vmax.f32 %v1585, 0.0
        %v1591 = vlaneseq
        %v1592 = vand.u32 %v1591, 127
        %v1593 = vld [vmem:[%s741] sm:$0xff]
        %1594 = vset.pattern.permute.xlu0 0
        %1595 = vperm.xlu0 %1594, %v1593
        %v1596 = vpop.permute.xlu0 %1595
        %vm1597 = vcmp.eq.s32.totalorder %v1592, %v1596
        %v1598 = vsel %vm1597, 1, 0
        %v1599 = vcvt.s32.f32 %v1598
        %v1600 = vld [vmem:[#allocation10] sm:$0xff]
        %v1601 = vld [vmem:[#allocation10 + $0x8] sm:$0xff]
        %v1602 = vld [vmem:[#allocation10 + $0x10] sm:$0xff]
        %v1603 = vld [vmem:[#allocation10 + $0x18] sm:$0xff]
        %v1604 = vld [vmem:[#allocation10 + $0x20] sm:$0xff]
        %v1605 = vld [vmem:[#allocation10 + $0x28] sm:$0xff]
        %vm1606 = vcmask 130048
        %v1608 = vsel %vm1606, %v1599, 0
        %1610 = vmatprep.subr.mxu0 0.0
        %1611 = vmatpush1.msra.mxu0 0.0
        %1612 = vmatprep.subr.mxu0 0.0
        %1613 = vmatpush1.msra.mxu0 0.0
        %1614 = vmatprep.subr.mxu0 0.0
        %1615 = vmatpush1.msra.mxu0 0.0
        %1616 = vmatprep.subr.mxu0 0.0
        %1617 = vmatpush1.msra.mxu0 0.0
        %1618 = vmatprep.subr.mxu0 0.0
        %1619 = vmatpush1.msra.mxu0 0.0
        %1620 = vmatprep.subr.mxu0 0.0
        %1621 = vmatpush1.msra.mxu0 0.0
        %1622 = vmatprep.subr.mxu0 0.0
        %1623 = vmatpush1.msra.mxu0 0.0
        %1624 = vmatprep.subr.mxu0 0.0
        %1625 = vmatpush1.msra.mxu0 0.0
        %1626 = vmatprep.subr.mxu0 0.0
        %1627 = vmatpush1.msra.mxu0 0.0
        %1628 = vmatprep.subr.mxu0 0.0
        %1629 = vmatpush1.msra.mxu0 0.0
        %1630 = vmatprep.subr.mxu0 0.0
        %1631 = vmatpush1.msra.mxu0 0.0
        %1632 = vmatprep.subr.mxu0 0.0
        %1633 = vmatpush1.msra.mxu0 0.0
        %1634 = vmatprep.subr.mxu0 0.0
        %1635 = vmatpush1.msra.mxu0 0.0
        %1636 = vmatprep.subr.mxu0 0.0
        %1637 = vmatpush1.msra.mxu0 0.0
        %1638 = vmatprep.subr.mxu0 %v1604
        %1639 = vmatpush1.msra.mxu0 %v1603
        %1640 = vmatprep.subr.mxu0 %v1601
        %1641 = vmatpush1.msra.mxu0 %v1600
        %1642 = vmatprep.subr.mxu0 0.0
        %1643 = vmatpush2.msra.mxu0 0.0
        %1644 = vmatprep.subr.mxu0 0.0
        %1645 = vmatpush2.msra.mxu0 0.0
        %1646 = vmatprep.subr.mxu0 0.0
        %1647 = vmatpush2.msra.mxu0 0.0
        %1648 = vmatprep.subr.mxu0 0.0
        %1649 = vmatpush2.msra.mxu0 0.0
        %1650 = vmatprep.subr.mxu0 0.0
        %1651 = vmatpush2.msra.mxu0 0.0
        %1652 = vmatprep.subr.mxu0 0.0
        %1653 = vmatpush2.msra.mxu0 0.0
        %1654 = vmatprep.subr.mxu0 0.0
        %1655 = vmatpush2.msra.mxu0 0.0
        %1656 = vmatprep.subr.mxu0 0.0
        %1657 = vmatpush2.msra.mxu0 0.0
        %1658 = vmatprep.subr.mxu0 0.0
        %1659 = vmatpush2.msra.mxu0 0.0
        %1660 = vmatprep.subr.mxu0 0.0
        %1661 = vmatpush2.msra.mxu0 0.0
        %1662 = vmatprep.subr.mxu0 0.0
        %1663 = vmatpush2.msra.mxu0 0.0
        %1664 = vmatprep.subr.mxu0 0.0
        %1665 = vmatpush2.msra.mxu0 0.0
        %1666 = vmatprep.subr.mxu0 0.0
        %1667 = vmatpush2.msra.mxu0 0.0
        %1668 = vmatprep.subr.mxu0 0.0
        %1669 = vmatpush2.msra.mxu0 0.0
        %1670 = vmatprep.subr.mxu0 0.0
        %1671 = vmatpush2.msra.mxu0 0.0
        %1672 = vmatprep.subr.mxu0 0.0
        %1673 = vmatpush2.msra.mxu0 0.0
        %1674 = vmatprep.mubr.f32.mxu0 0.0
        %1675 = vmatmul.mubr.f32.gmra.mxu0 %v1608
        %v1676 = vpop.f32.mrf.mxu0
        %v1677 = vadd.f32 0.0, %v1676
        %v1678 = vpop.f32.mrf.mxu0
        %v1679 = vadd.f32 0.0, %v1678
        %1680 = vdwg.mxu0
        %1681 = vmatprep.subr.mxu0 0.0
        %1682 = vmatpush1.msra.mxu0 0.0
        %1683 = vmatprep.subr.mxu0 0.0
        %1684 = vmatpush1.msra.mxu0 0.0
        %1685 = vmatprep.subr.mxu0 0.0
        %1686 = vmatpush1.msra.mxu0 0.0
        %1687 = vmatprep.subr.mxu0 0.0
        %1688 = vmatpush1.msra.mxu0 0.0
        %1689 = vmatprep.subr.mxu0 0.0
        %1690 = vmatpush1.msra.mxu0 0.0
        %1691 = vmatprep.subr.mxu0 0.0
        %1692 = vmatpush1.msra.mxu0 0.0
        %1693 = vmatprep.subr.mxu0 0.0
        %1694 = vmatpush1.msra.mxu0 0.0
        %1695 = vmatprep.subr.mxu0 0.0
        %1696 = vmatpush1.msra.mxu0 0.0
        %1697 = vmatprep.subr.mxu0 0.0
        %1698 = vmatpush1.msra.mxu0 0.0
        %1699 = vmatprep.subr.mxu0 0.0
        %1700 = vmatpush1.msra.mxu0 0.0
        %1701 = vmatprep.subr.mxu0 0.0
        %1702 = vmatpush1.msra.mxu0 0.0
        %1703 = vmatprep.subr.mxu0 0.0
        %1704 = vmatpush1.msra.mxu0 0.0
        %1705 = vmatprep.subr.mxu0 0.0
        %1706 = vmatpush1.msra.mxu0 0.0
        %1707 = vmatprep.subr.mxu0 0.0
        %1708 = vmatpush1.msra.mxu0 0.0
        %1709 = vmatprep.subr.mxu0 0.0
        %1710 = vmatpush1.msra.mxu0 %v1605
        %1711 = vmatprep.subr.mxu0 0.0
        %1712 = vmatpush1.msra.mxu0 %v1602
        %1713 = vmatprep.subr.mxu0 0.0
        %1714 = vmatpush2.msra.mxu0 0.0
        %1715 = vmatprep.subr.mxu0 0.0
        %1716 = vmatpush2.msra.mxu0 0.0
        %1717 = vmatprep.subr.mxu0 0.0
        %1718 = vmatpush2.msra.mxu0 0.0
        %1719 = vmatprep.subr.mxu0 0.0
        %1720 = vmatpush2.msra.mxu0 0.0
        %1721 = vmatprep.subr.mxu0 0.0
        %1722 = vmatpush2.msra.mxu0 0.0
        %1723 = vmatprep.subr.mxu0 0.0
        %1724 = vmatpush2.msra.mxu0 0.0
        %1725 = vmatprep.subr.mxu0 0.0
        %1726 = vmatpush2.msra.mxu0 0.0
        %1727 = vmatprep.subr.mxu0 0.0
        %1728 = vmatpush2.msra.mxu0 0.0
        %1729 = vmatprep.subr.mxu0 0.0
        %1730 = vmatpush2.msra.mxu0 0.0
        %1731 = vmatprep.subr.mxu0 0.0
        %1732 = vmatpush2.msra.mxu0 0.0
        %1733 = vmatprep.subr.mxu0 0.0
        %1734 = vmatpush2.msra.mxu0 0.0
        %1735 = vmatprep.subr.mxu0 0.0
        %1736 = vmatpush2.msra.mxu0 0.0
        %1737 = vmatprep.subr.mxu0 0.0
        %1738 = vmatpush2.msra.mxu0 0.0
        %1739 = vmatprep.subr.mxu0 0.0
        %1740 = vmatpush2.msra.mxu0 0.0
        %1741 = vmatprep.subr.mxu0 0.0
        %1742 = vmatpush2.msra.mxu0 0.0
        %1743 = vmatprep.subr.mxu0 0.0
        %1744 = vmatpush2.msra.mxu0 0.0
        %1745 = vmatprep.mubr.f32.mxu0 0.0
        %1746 = vmatmul.mubr.f32.gmra.mxu0 %v1608
        %v1747 = vpop.f32.mrf.mxu0
        %v1748 = vadd.f32 0.0, %v1747
        %v1749 = vpop.f32.mrf.mxu0
        %1750 = vdwg.mxu0
        %v1751 = vld [vmem:[#allocation8] sm:$0xff]
        %v1752 = vld [vmem:[#allocation8 + $0x8] sm:$0xff]
        %v1753 = vld [vmem:[#allocation8 + $0x10] sm:$0xff]
        %v1754 = vld [vmem:[#allocation8 + $0x18] sm:$0xff]
        %v1755 = vld [vmem:[#allocation8 + $0x20] sm:$0xff]
        %v1756 = vld [vmem:[#allocation8 + $0x28] sm:$0xff]
        %v1757 = vld [vmem:[#allocation8 + $0x30] sm:$0xff]
        %v1758 = vld [vmem:[#allocation8 + $0x38] sm:$0xff]
        %v1759 = vld [vmem:[#allocation8 + $0x40] sm:$0xff]
        %v1760 = vld [vmem:[#allocation8 + $0x48] sm:$0xff]
        %v1761 = vld [vmem:[#allocation8 + $0x50] sm:$0xff]
        %v1762 = vld [vmem:[#allocation8 + $0x58] sm:$0xff]
        %v1763 = vld [vmem:[#allocation8 + $0x60] sm:$0xff]
        %v1764 = vld [vmem:[#allocation8 + $0x68] sm:$0xff]
        %v1765 = vld [vmem:[#allocation8 + $0x70] sm:$0xff]
        %v1766 = vld [vmem:[#allocation8 + $0x78] sm:$0xff]
        %v1767 = vld [vmem:[#allocation8 + $0x80] sm:$0xff]
        %v1768 = vld [vmem:[#allocation8 + $0x88] sm:$0xff]
        %v1769 = vld [vmem:[#allocation8 + $0x90] sm:$0xff]
        %v1770 = vld [vmem:[#allocation8 + $0x98] sm:$0xff]
        %v1771 = vld [vmem:[#allocation8 + $0xa0] sm:$0xff]
        %v1772 = vld [vmem:[#allocation8 + $0xa8] sm:$0xff]
        %v1773 = vld [vmem:[#allocation8 + $0xb0] sm:$0xff]
        %v1774 = vld [vmem:[#allocation8 + $0xb8] sm:$0xff]
        %v1775 = vld [vmem:[#allocation8 + $0xc0] sm:$0xff]
        %v1776 = vld [vmem:[#allocation8 + $0xc8] sm:$0xff]
        %v1777 = vld [vmem:[#allocation8 + $0xd0] sm:$0xff]
        %v1778 = vld [vmem:[#allocation8 + $0xd8] sm:$0xff]
        %v1779 = vld [vmem:[#allocation8 + $0xe0] sm:$0xff]
        %v1780 = vld [vmem:[#allocation8 + $0xe8] sm:$0xff]
        %v1781 = vld [vmem:[#allocation8 + $0xf0] sm:$0xff]
        %v1782 = vld [vmem:[#allocation8 + $0xf8] sm:$0xff]
        %1783 = vmatprep.subr.mxu0 %v1782
        %1784 = vmatpush1.msra.mxu0 %v1781
        %1785 = vmatprep.subr.mxu0 %v1780
        %1786 = vmatpush1.msra.mxu0 %v1779
        %1787 = vmatprep.subr.mxu0 %v1778
        %1788 = vmatpush1.msra.mxu0 %v1777
        %1789 = vmatprep.subr.mxu0 %v1776
        %1790 = vmatpush1.msra.mxu0 %v1775
        %1791 = vmatprep.subr.mxu0 %v1774
        %1792 = vmatpush1.msra.mxu0 %v1773
        %1793 = vmatprep.subr.mxu0 %v1772
        %1794 = vmatpush1.msra.mxu0 %v1771
        %1795 = vmatprep.subr.mxu0 %v1770
        %1796 = vmatpush1.msra.mxu0 %v1769
        %1797 = vmatprep.subr.mxu0 %v1768
        %1798 = vmatpush1.msra.mxu0 %v1767
        %1799 = vmatprep.subr.mxu0 %v1766
        %1800 = vmatpush1.msra.mxu0 %v1765
        %1801 = vmatprep.subr.mxu0 %v1764
        %1802 = vmatpush1.msra.mxu0 %v1763
        %1803 = vmatprep.subr.mxu0 %v1762
        %1804 = vmatpush1.msra.mxu0 %v1761
        %1805 = vmatprep.subr.mxu0 %v1760
        %1806 = vmatpush1.msra.mxu0 %v1759
        %1807 = vmatprep.subr.mxu0 %v1758
        %1808 = vmatpush1.msra.mxu0 %v1757
        %1809 = vmatprep.subr.mxu0 %v1756
        %1810 = vmatpush1.msra.mxu0 %v1755
        %1811 = vmatprep.subr.mxu0 %v1754
        %1812 = vmatpush1.msra.mxu0 %v1753
        %1813 = vmatprep.subr.mxu0 %v1752
        %1814 = vmatpush1.msra.mxu0 %v1751
        %1815 = vmatprep.subr.mxu0 0.0
        %1816 = vmatpush2.msra.mxu0 0.0
        %1817 = vmatprep.subr.mxu0 0.0
        %1818 = vmatpush2.msra.mxu0 0.0
        %1819 = vmatprep.subr.mxu0 0.0
        %1820 = vmatpush2.msra.mxu0 0.0
        %1821 = vmatprep.subr.mxu0 0.0
        %1822 = vmatpush2.msra.mxu0 0.0
        %1823 = vmatprep.subr.mxu0 0.0
        %1824 = vmatpush2.msra.mxu0 0.0
        %1825 = vmatprep.subr.mxu0 0.0
        %1826 = vmatpush2.msra.mxu0 0.0
        %1827 = vmatprep.subr.mxu0 0.0
        %1828 = vmatpush2.msra.mxu0 0.0
        %1829 = vmatprep.subr.mxu0 0.0
        %1830 = vmatpush2.msra.mxu0 0.0
        %1831 = vmatprep.subr.mxu0 0.0
        %1832 = vmatpush2.msra.mxu0 0.0
        %1833 = vmatprep.subr.mxu0 0.0
        %1834 = vmatpush2.msra.mxu0 0.0
        %1835 = vmatprep.subr.mxu0 0.0
        %1836 = vmatpush2.msra.mxu0 0.0
        %1837 = vmatprep.subr.mxu0 0.0
        %1838 = vmatpush2.msra.mxu0 0.0
        %1839 = vmatprep.subr.mxu0 0.0
        %1840 = vmatpush2.msra.mxu0 0.0
        %1841 = vmatprep.subr.mxu0 0.0
        %1842 = vmatpush2.msra.mxu0 0.0
        %1843 = vmatprep.subr.mxu0 0.0
        %1844 = vmatpush2.msra.mxu0 0.0
        %1845 = vmatprep.subr.mxu0 0.0
        %1846 = vmatpush2.msra.mxu0 0.0
        %1847 = vmatprep.mubr.f32.mxu0 0.0
        %1848 = vmatmul.mubr.f32.gmra.mxu0 %v1590
        %v1849 = vpop.f32.mrf.mxu0
        %v1850 = vadd.f32 %v1677, %v1849
        %v1851 = vpop.f32.mrf.mxu0
        %v1852 = vadd.f32 %v1679, %v1851
        %1853 = vdwg.mxu0
        %v1854 = vld [vmem:[%s9] sm:$0x3]
        %v1856 = vlaneseq
        %v1857 = vshrl.u32 %v1856, 7
        %v1858 = vsub.s32 0, %v1857
        %v1859 = vrot.slane %v1854, %v1858
        %v1860 = vlaneseq
        %v1861 = vshrl.u32 %v1860, 7
        %v1862 = vsub.s32 1, %v1861
        %v1863 = vrot.slane %v1854, %v1862
        %v1866 = vadd.f32 %v1850, %v1859
        %v1867 = vadd.f32 %v1852, %v1863
        %v1868 = vmul.f32 %v1867, 0.5
        %v1869 = vmul.f32 %v1868, 1.442695
        %v1870 = vpow.pop %v1869
        %v1871 = vld [vmem:[%s745] sm:$0xff]
        %v1872 = vmul.f32 %v1870, %v1871
        %v1873 = vadd.f32 %v1866, %v1872
        %v1874 = vpack.c.bf16 %v1873, %v1873
        %v1875 = vld [vmem:[#allocation11] sm:$0xf]
        %v1876 = vld [vmem:[#allocation11 + $0x4] sm:$0xf]
        %v1877 = vld [vmem:[#allocation11 + $0x8] sm:$0xf]
        %v1878 = vld [vmem:[#allocation11 + $0xc] sm:$0xf]
        %v1879 = vld [vmem:[#allocation11 + $0x10] sm:$0xf]
        %v1880 = vld [vmem:[#allocation11 + $0x14] sm:$0xf]
        %v1881 = vld [vmem:[#allocation11 + $0x18] sm:$0xf]
        %v1882 = vld [vmem:[#allocation11 + $0x1c] sm:$0xf]
        %v1883 = vld [vmem:[#allocation11 + $0x20] sm:$0xf]
        %v1884 = vld [vmem:[#allocation11 + $0x24] sm:$0xf]
        %v1885 = vld [vmem:[#allocation11 + $0x28] sm:$0xf]
        %v1886 = vld [vmem:[#allocation11 + $0x2c] sm:$0xf]
        %v1887 = vld [vmem:[#allocation11 + $0x30] sm:$0xf]
        %v1888 = vld [vmem:[#allocation11 + $0x34] sm:$0xf]
        %v1889 = vld [vmem:[#allocation11 + $0x38] sm:$0xf]
        %v1890 = vld [vmem:[#allocation11 + $0x3c] sm:$0xf]
        %v1907 = vunpack.c.l.b16 %v1875
        %v1908 = vunpack.c.l.b16 %v1876
        %v1909 = vunpack.c.l.b16 %v1877
        %v1910 = vunpack.c.l.b16 %v1878
        %v1911 = vunpack.c.l.b16 %v1879
        %v1912 = vunpack.c.l.b16 %v1880
        %v1913 = vunpack.c.l.b16 %v1881
        %v1914 = vunpack.c.l.b16 %v1882
        %v1915 = vunpack.c.l.b16 %v1883
        %v1916 = vunpack.c.l.b16 %v1884
        %v1917 = vunpack.c.l.b16 %v1885
        %v1918 = vunpack.c.l.b16 %v1886
        %v1919 = vunpack.c.l.b16 %v1887
        %v1920 = vunpack.c.l.b16 %v1888
        %v1921 = vunpack.c.l.b16 %v1889
        %v1922 = vunpack.c.l.b16 %v1890
        %v1923 = vpack.c.b16 %v1908, %v1907
        %v1924 = vpack.c.b16 %v1910, %v1909
        %v1925 = vpack.c.b16 %v1912, %v1911
        %v1926 = vpack.c.b16 %v1914, %v1913
        %v1927 = vpack.c.b16 %v1916, %v1915
        %v1928 = vpack.c.b16 %v1918, %v1917
        %v1929 = vpack.c.b16 %v1920, %v1919
        %v1930 = vpack.c.b16 %v1922, %v1921
        %1939 = vmatprep.subr.bf16.mxu0 0
        %1940 = vmatpush1.bf16.msra.mxu0 %v1930
        %1941 = vmatprep.subr.bf16.mxu0 0
        %1942 = vmatpush1.bf16.msra.mxu0 %v1929
        %1943 = vmatprep.subr.bf16.mxu0 0
        %1944 = vmatpush1.bf16.msra.mxu0 %v1928
        %1945 = vmatprep.subr.bf16.mxu0 0
        %1946 = vmatpush1.bf16.msra.mxu0 %v1927
        %1947 = vmatprep.subr.bf16.mxu0 0
        %1948 = vmatpush1.bf16.msra.mxu0 %v1926
        %1949 = vmatprep.subr.bf16.mxu0 0
        %1950 = vmatpush1.bf16.msra.mxu0 %v1925
        %1951 = vmatprep.subr.bf16.mxu0 0
        %1952 = vmatpush1.bf16.msra.mxu0 %v1924
        %1953 = vmatprep.subr.bf16.mxu0 0
        %1954 = vmatpush1.bf16.msra.mxu0 %v1923
        %1955 = vmatprep.subr.bf16.mxu0 0
        %1956 = vmatpush2.bf16.msra.mxu0 0
        %1957 = vmatprep.subr.bf16.mxu0 0
        %1958 = vmatpush2.bf16.msra.mxu0 0
        %1959 = vmatprep.subr.bf16.mxu0 0
        %1960 = vmatpush2.bf16.msra.mxu0 0
        %1961 = vmatprep.subr.bf16.mxu0 0
        %1962 = vmatpush2.bf16.msra.mxu0 0
        %1963 = vmatprep.subr.bf16.mxu0 0
        %1964 = vmatpush2.bf16.msra.mxu0 0
        %1965 = vmatprep.subr.bf16.mxu0 0
        %1966 = vmatpush2.bf16.msra.mxu0 0
        %1967 = vmatprep.subr.bf16.mxu0 0
        %1968 = vmatpush2.bf16.msra.mxu0 0
        %1969 = vmatprep.subr.bf16.mxu0 0
        %1970 = vmatpush2.bf16.msra.mxu0 0
        %1971 = vmatprep.mubr.bf16.mxu0 0
        %1972 = vmatmul.mubr.bf16.gmra.mxu0 %v1874
        %v1973 = vpop.f32.mrf.mxu0
        %v1974 = vadd.f32 %v1748, %v1973
        %v1975 = vpop.f32.mrf.mxu0
        %v1976 = vpop.f32.mrf.mxu0
        %v1977 = vpop.f32.mrf.mxu0
        %1978 = vdwg.mxu0
        %v1979 = vld [vmem:[%s11] sm:$0x1]
        %v1981 = vlaneseq
        %v1982 = vshrl.u32 %v1981, 7
        %v1983 = vsub.s32 0, %v1982
        %v1984 = vrot.slane %v1979, %v1983
        %v1986 = vadd.f32 %v1974, %v1984
        %v1987 = vmax.f32 %v1986, 0.0
        %v1988 = vpack.c.bf16 %v1987, %v1987
        %v1989 = vld [vmem:[#allocation13] sm:$0xff]
        %v1990 = vld [vmem:[#allocation13 + $0x8] sm:$0xff]
        %v1991 = vld [vmem:[#allocation13 + $0x10] sm:$0xff]
        %v1992 = vld [vmem:[#allocation13 + $0x18] sm:$0xff]
        %v1993 = vld [vmem:[#allocation13 + $0x20] sm:$0xff]
        %v1994 = vld [vmem:[#allocation13 + $0x28] sm:$0xff]
        %v1995 = vld [vmem:[#allocation13 + $0x30] sm:$0xff]
        %v1996 = vld [vmem:[#allocation13 + $0x38] sm:$0xff]
        %v1997 = vld [vmem:[#allocation13 + $0x40] sm:$0xff]
        %v1998 = vld [vmem:[#allocation13 + $0x48] sm:$0xff]
        %v1999 = vld [vmem:[#allocation13 + $0x50] sm:$0xff]
        %v2000 = vld [vmem:[#allocation13 + $0x58] sm:$0xff]
        %v2001 = vld [vmem:[#allocation13 + $0x60] sm:$0xff]
        %v2002 = vld [vmem:[#allocation13 + $0x68] sm:$0xff]
        %v2003 = vld [vmem:[#allocation13 + $0x70] sm:$0xff]
        %v2004 = vld [vmem:[#allocation13 + $0x78] sm:$0xff]
        %v2005 = vld [vmem:[#allocation13 + $0x80] sm:$0xff]
        %v2006 = vld [vmem:[#allocation13 + $0x88] sm:$0xff]
        %v2007 = vld [vmem:[#allocation13 + $0x90] sm:$0xff]
        %v2008 = vld [vmem:[#allocation13 + $0x98] sm:$0xff]
        %v2009 = vld [vmem:[#allocation13 + $0xa0] sm:$0xff]
        %v2010 = vld [vmem:[#allocation13 + $0xa8] sm:$0xff]
        %v2011 = vld [vmem:[#allocation13 + $0xb0] sm:$0xff]
        %v2012 = vld [vmem:[#allocation13 + $0xb8] sm:$0xff]
        %v2013 = vld [vmem:[#allocation13 + $0xc0] sm:$0xff]
        %v2014 = vld [vmem:[#allocation13 + $0xc8] sm:$0xff]
        %v2015 = vld [vmem:[#allocation13 + $0xd0] sm:$0xff]
        %v2016 = vld [vmem:[#allocation13 + $0xd8] sm:$0xff]
        %v2017 = vld [vmem:[#allocation13 + $0xe0] sm:$0xff]
        %v2018 = vld [vmem:[#allocation13 + $0xe8] sm:$0xff]
        %v2019 = vld [vmem:[#allocation13 + $0xf0] sm:$0xff]
        %v2020 = vld [vmem:[#allocation13 + $0xf8] sm:$0xff]
        %v2021 = vld [vmem:[%s13] sm:$0xf]
        %v2023 = vlaneseq
        %v2024 = vshrl.u32 %v2023, 7
        %v2025 = vsub.s32 0, %v2024
        %v2026 = vrot.slane %v2021, %v2025
        %v2027 = vlaneseq
        %v2028 = vshrl.u32 %v2027, 7
        %v2029 = vsub.s32 1, %v2028
        %v2030 = vrot.slane %v2021, %v2029
        %v2031 = vlaneseq
        %v2032 = vshrl.u32 %v2031, 7
        %v2033 = vsub.s32 2, %v2032
        %v2034 = vrot.slane %v2021, %v2033
        %v2035 = vlaneseq
        %v2036 = vshrl.u32 %v2035, 7
        %v2037 = vsub.s32 3, %v2036
        %v2038 = vrot.slane %v2021, %v2037
        %v2075 = vunpack.c.l.b16 %v1989
        %v2076 = vunpack.c.h.b16 %v1989
        %v2077 = vunpack.c.l.b16 %v1990
        %v2078 = vunpack.c.h.b16 %v1990
        %v2079 = vunpack.c.l.b16 %v1991
        %v2080 = vunpack.c.h.b16 %v1991
        %v2081 = vunpack.c.l.b16 %v1992
        %v2082 = vunpack.c.h.b16 %v1992
        %v2083 = vunpack.c.l.b16 %v1993
        %v2084 = vunpack.c.h.b16 %v1993
        %v2085 = vunpack.c.l.b16 %v1994
        %v2086 = vunpack.c.h.b16 %v1994
        %v2087 = vunpack.c.l.b16 %v1995
        %v2088 = vunpack.c.h.b16 %v1995
        %v2089 = vunpack.c.l.b16 %v1996
        %v2090 = vunpack.c.h.b16 %v1996
        %v2091 = vunpack.c.l.b16 %v1997
        %v2092 = vunpack.c.h.b16 %v1997
        %v2093 = vunpack.c.l.b16 %v1998
        %v2094 = vunpack.c.h.b16 %v1998
        %v2095 = vunpack.c.l.b16 %v1999
        %v2096 = vunpack.c.h.b16 %v1999
        %v2097 = vunpack.c.l.b16 %v2000
        %v2098 = vunpack.c.h.b16 %v2000
        %v2099 = vunpack.c.l.b16 %v2001
        %v2100 = vunpack.c.h.b16 %v2001
        %v2101 = vunpack.c.l.b16 %v2002
        %v2102 = vunpack.c.h.b16 %v2002
        %v2103 = vunpack.c.l.b16 %v2003
        %v2104 = vunpack.c.h.b16 %v2003
        %v2105 = vunpack.c.l.b16 %v2004
        %v2106 = vunpack.c.h.b16 %v2004
        %v2107 = vunpack.c.l.b16 %v2005
        %v2108 = vunpack.c.h.b16 %v2005
        %v2109 = vunpack.c.l.b16 %v2006
        %v2110 = vunpack.c.h.b16 %v2006
        %v2111 = vunpack.c.l.b16 %v2007
        %v2112 = vunpack.c.h.b16 %v2007
        %v2113 = vunpack.c.l.b16 %v2008
        %v2114 = vunpack.c.h.b16 %v2008
        %v2115 = vunpack.c.l.b16 %v2009
        %v2116 = vunpack.c.h.b16 %v2009
        %v2117 = vunpack.c.l.b16 %v2010
        %v2118 = vunpack.c.h.b16 %v2010
        %v2119 = vunpack.c.l.b16 %v2011
        %v2120 = vunpack.c.h.b16 %v2011
        %v2121 = vunpack.c.l.b16 %v2012
        %v2122 = vunpack.c.h.b16 %v2012
        %v2123 = vunpack.c.l.b16 %v2013
        %v2124 = vunpack.c.h.b16 %v2013
        %v2125 = vunpack.c.l.b16 %v2014
        %v2126 = vunpack.c.h.b16 %v2014
        %v2127 = vunpack.c.l.b16 %v2015
        %v2128 = vunpack.c.h.b16 %v2015
        %v2129 = vunpack.c.l.b16 %v2016
        %v2130 = vunpack.c.h.b16 %v2016
        %v2131 = vunpack.c.l.b16 %v2017
        %v2132 = vunpack.c.h.b16 %v2017
        %v2133 = vunpack.c.l.b16 %v2018
        %v2134 = vunpack.c.h.b16 %v2018
        %v2135 = vunpack.c.l.b16 %v2019
        %v2136 = vunpack.c.h.b16 %v2019
        %v2137 = vunpack.c.l.b16 %v2020
        %v2138 = vunpack.c.h.b16 %v2020
        %v2139 = vpack.c.b16 %v2079, %v2075
        %v2140 = vpack.c.b16 %v2080, %v2076
        %v2141 = vpack.c.b16 %v2081, %v2077
        %v2142 = vpack.c.b16 %v2082, %v2078
        %v2143 = vpack.c.b16 %v2087, %v2083
        %v2144 = vpack.c.b16 %v2088, %v2084
        %v2145 = vpack.c.b16 %v2089, %v2085
        %v2146 = vpack.c.b16 %v2090, %v2086
        %v2147 = vpack.c.b16 %v2095, %v2091
        %v2148 = vpack.c.b16 %v2096, %v2092
        %v2149 = vpack.c.b16 %v2097, %v2093
        %v2150 = vpack.c.b16 %v2098, %v2094
        %v2151 = vpack.c.b16 %v2103, %v2099
        %v2152 = vpack.c.b16 %v2104, %v2100
        %v2153 = vpack.c.b16 %v2105, %v2101
        %v2154 = vpack.c.b16 %v2106, %v2102
        %v2155 = vpack.c.b16 %v2111, %v2107
        %v2156 = vpack.c.b16 %v2112, %v2108
        %v2157 = vpack.c.b16 %v2113, %v2109
        %v2158 = vpack.c.b16 %v2114, %v2110
        %v2159 = vpack.c.b16 %v2119, %v2115
        %v2160 = vpack.c.b16 %v2120, %v2116
        %v2161 = vpack.c.b16 %v2121, %v2117
        %v2162 = vpack.c.b16 %v2122, %v2118
        %v2163 = vpack.c.b16 %v2127, %v2123
        %v2164 = vpack.c.b16 %v2128, %v2124
        %v2165 = vpack.c.b16 %v2129, %v2125
        %v2166 = vpack.c.b16 %v2130, %v2126
        %v2167 = vpack.c.b16 %v2135, %v2131
        %v2168 = vpack.c.b16 %v2136, %v2132
        %v2169 = vpack.c.b16 %v2137, %v2133
        %v2170 = vpack.c.b16 %v2138, %v2134
        %2203 = vmatprep.subr.bf16.mxu0 %v2168
        %2204 = vmatpush1.bf16.msra.mxu0 %v2167
        %2205 = vmatprep.subr.bf16.mxu0 %v2164
        %2206 = vmatpush1.bf16.msra.mxu0 %v2163
        %2207 = vmatprep.subr.bf16.mxu0 %v2160
        %2208 = vmatpush1.bf16.msra.mxu0 %v2159
        %2209 = vmatprep.subr.bf16.mxu0 %v2156
        %2210 = vmatpush1.bf16.msra.mxu0 %v2155
        %2211 = vmatprep.subr.bf16.mxu0 %v2152
        %2212 = vmatpush1.bf16.msra.mxu0 %v2151
        %2213 = vmatprep.subr.bf16.mxu0 %v2148
        %2214 = vmatpush1.bf16.msra.mxu0 %v2147
        %2215 = vmatprep.subr.bf16.mxu0 %v2144
        %2216 = vmatpush1.bf16.msra.mxu0 %v2143
        %2217 = vmatprep.subr.bf16.mxu0 %v2140
        %2218 = vmatpush1.bf16.msra.mxu0 %v2139
        %2219 = vmatprep.subr.bf16.mxu0 0
        %2220 = vmatpush2.bf16.msra.mxu0 0
        %2221 = vmatprep.subr.bf16.mxu0 0
        %2222 = vmatpush2.bf16.msra.mxu0 0
        %2223 = vmatprep.subr.bf16.mxu0 0
        %2224 = vmatpush2.bf16.msra.mxu0 0
        %2225 = vmatprep.subr.bf16.mxu0 0
        %2226 = vmatpush2.bf16.msra.mxu0 0
        %2227 = vmatprep.subr.bf16.mxu0 0
        %2228 = vmatpush2.bf16.msra.mxu0 0
        %2229 = vmatprep.subr.bf16.mxu0 0
        %2230 = vmatpush2.bf16.msra.mxu0 0
        %2231 = vmatprep.subr.bf16.mxu0 0
        %2232 = vmatpush2.bf16.msra.mxu0 0
        %2233 = vmatprep.subr.bf16.mxu0 0
        %2234 = vmatpush2.bf16.msra.mxu0 0
        %2235 = vmatprep.mubr.bf16.mxu0 0
        %2236 = vmatmul.mubr.bf16.gmra.mxu0 %v1988
        %v2237 = vpop.f32.mrf.mxu0
        %v2238 = vadd.f32 %v2026, %v2237
        %v2239 = vpop.f32.mrf.mxu0
        %v2240 = vadd.f32 %v2030, %v2239
        %v2241 = vpop.f32.mrf.mxu0
        %v2242 = vpop.f32.mrf.mxu0
        %2243 = vdwg.mxu0
        %2244 = vmatprep.subr.bf16.mxu0 %v2170
        %2245 = vmatpush1.bf16.msra.mxu0 %v2169
        %2246 = vmatprep.subr.bf16.mxu0 %v2166
        %2247 = vmatpush1.bf16.msra.mxu0 %v2165
        %2248 = vmatprep.subr.bf16.mxu0 %v2162
        %2249 = vmatpush1.bf16.msra.mxu0 %v2161
        %2250 = vmatprep.subr.bf16.mxu0 %v2158
        %2251 = vmatpush1.bf16.msra.mxu0 %v2157
        %2252 = vmatprep.subr.bf16.mxu0 %v2154
        %2253 = vmatpush1.bf16.msra.mxu0 %v2153
        %2254 = vmatprep.subr.bf16.mxu0 %v2150
        %2255 = vmatpush1.bf16.msra.mxu0 %v2149
        %2256 = vmatprep.subr.bf16.mxu0 %v2146
        %2257 = vmatpush1.bf16.msra.mxu0 %v2145
        %2258 = vmatprep.subr.bf16.mxu0 %v2142
        %2259 = vmatpush1.bf16.msra.mxu0 %v2141
        %2260 = vmatprep.subr.bf16.mxu0 0
        %2261 = vmatpush2.bf16.msra.mxu0 0
        %2262 = vmatprep.subr.bf16.mxu0 0
        %2263 = vmatpush2.bf16.msra.mxu0 0
        %2264 = vmatprep.subr.bf16.mxu0 0
        %2265 = vmatpush2.bf16.msra.mxu0 0
        %2266 = vmatprep.subr.bf16.mxu0 0
        %2267 = vmatpush2.bf16.msra.mxu0 0
        %2268 = vmatprep.subr.bf16.mxu0 0
        %2269 = vmatpush2.bf16.msra.mxu0 0
        %2270 = vmatprep.subr.bf16.mxu0 0
        %2271 = vmatpush2.bf16.msra.mxu0 0
        %2272 = vmatprep.subr.bf16.mxu0 0
        %2273 = vmatpush2.bf16.msra.mxu0 0
        %2274 = vmatprep.subr.bf16.mxu0 0
        %2275 = vmatpush2.bf16.msra.mxu0 0
        %2276 = vmatprep.mubr.bf16.mxu0 0
        %2277 = vmatmul.mubr.bf16.gmra.mxu0 %v1988
        %v2278 = vpop.f32.mrf.mxu0
        %v2279 = vadd.f32 %v2034, %v2278
        %v2280 = vpop.f32.mrf.mxu0
        %v2281 = vadd.f32 %v2038, %v2280
        %v2282 = vpop.f32.mrf.mxu0
        %v2283 = vpop.f32.mrf.mxu0
        %2284 = vdwg.mxu0
        %v2285 = vmax.f32 %v2238, 0.0
        %v2286 = vmax.f32 %v2240, 0.0
        %v2287 = vmax.f32 %v2279, 0.0
        %v2288 = vmax.f32 %v2281, 0.0
        %v2289 = vpack.c.bf16 %v2285, %v2285
        %v2290 = vpack.c.bf16 %v2286, %v2286
        %v2291 = vpack.c.bf16 %v2287, %v2287
        %v2292 = vpack.c.bf16 %v2288, %v2288
        %v2293 = vld [vmem:[#allocation14] sm:$0xff]
        %v2294 = vld [vmem:[#allocation14 + $0x8] sm:$0xff]
        %v2295 = vld [vmem:[#allocation14 + $0x10] sm:$0xff]
        %v2296 = vld [vmem:[#allocation14 + $0x18] sm:$0xff]
        %v2297 = vld [vmem:[#allocation14 + $0x20] sm:$0xff]
        %v2298 = vld [vmem:[#allocation14 + $0x28] sm:$0xff]
        %v2299 = vld [vmem:[#allocation14 + $0x30] sm:$0xff]
        %v2300 = vld [vmem:[#allocation14 + $0x38] sm:$0xff]
        %v2301 = vld [vmem:[#allocation14 + $0x40] sm:$0xff]
        %v2302 = vld [vmem:[#allocation14 + $0x48] sm:$0xff]
        %v2303 = vld [vmem:[#allocation14 + $0x50] sm:$0xff]
        %v2304 = vld [vmem:[#allocation14 + $0x58] sm:$0xff]
        %v2305 = vld [vmem:[#allocation14 + $0x60] sm:$0xff]
        %v2306 = vld [vmem:[#allocation14 + $0x68] sm:$0xff]
        %v2307 = vld [vmem:[#allocation14 + $0x70] sm:$0xff]
        %v2308 = vld [vmem:[#allocation14 + $0x78] sm:$0xff]
        %v2309 = vld [vmem:[#allocation14 + $0x80] sm:$0xff]
        %v2310 = vld [vmem:[#allocation14 + $0x88] sm:$0xff]
        %v2311 = vld [vmem:[#allocation14 + $0x90] sm:$0xff]
        %v2312 = vld [vmem:[#allocation14 + $0x98] sm:$0xff]
        %v2313 = vld [vmem:[#allocation14 + $0xa0] sm:$0xff]
        %v2314 = vld [vmem:[#allocation14 + $0xa8] sm:$0xff]
        %v2315 = vld [vmem:[#allocation14 + $0xb0] sm:$0xff]
        %v2316 = vld [vmem:[#allocation14 + $0xb8] sm:$0xff]
        %v2317 = vld [vmem:[#allocation14 + $0xc0] sm:$0xff]
        %v2318 = vld [vmem:[#allocation14 + $0xc8] sm:$0xff]
        %v2319 = vld [vmem:[#allocation14 + $0xd0] sm:$0xff]
        %v2320 = vld [vmem:[#allocation14 + $0xd8] sm:$0xff]
        %v2321 = vld [vmem:[#allocation14 + $0xe0] sm:$0xff]
        %v2322 = vld [vmem:[#allocation14 + $0xe8] sm:$0xff]
        %v2323 = vld [vmem:[#allocation14 + $0xf0] sm:$0xff]
        %v2324 = vld [vmem:[#allocation14 + $0xf8] sm:$0xff]
        %v2325 = vld [vmem:[#allocation14 + $0x100] sm:$0xff]
        %v2326 = vld [vmem:[#allocation14 + $0x108] sm:$0xff]
        %v2327 = vld [vmem:[#allocation14 + $0x110] sm:$0xff]
        %v2328 = vld [vmem:[#allocation14 + $0x118] sm:$0xff]
        %v2329 = vld [vmem:[#allocation14 + $0x120] sm:$0xff]
        %v2330 = vld [vmem:[#allocation14 + $0x128] sm:$0xff]
        %v2331 = vld [vmem:[#allocation14 + $0x130] sm:$0xff]
        %v2332 = vld [vmem:[#allocation14 + $0x138] sm:$0xff]
        %v2333 = vld [vmem:[#allocation14 + $0x140] sm:$0xff]
        %v2334 = vld [vmem:[#allocation14 + $0x148] sm:$0xff]
        %v2335 = vld [vmem:[#allocation14 + $0x150] sm:$0xff]
        %v2336 = vld [vmem:[#allocation14 + $0x158] sm:$0xff]
        %v2337 = vld [vmem:[#allocation14 + $0x160] sm:$0xff]
        %v2338 = vld [vmem:[#allocation14 + $0x168] sm:$0xff]
        %v2339 = vld [vmem:[#allocation14 + $0x170] sm:$0xff]
        %v2340 = vld [vmem:[#allocation14 + $0x178] sm:$0xff]
        %v2341 = vld [vmem:[#allocation14 + $0x180] sm:$0xff]
        %v2342 = vld [vmem:[#allocation14 + $0x188] sm:$0xff]
        %v2343 = vld [vmem:[#allocation14 + $0x190] sm:$0xff]
        %v2344 = vld [vmem:[#allocation14 + $0x198] sm:$0xff]
        %v2345 = vld [vmem:[#allocation14 + $0x1a0] sm:$0xff]
        %v2346 = vld [vmem:[#allocation14 + $0x1a8] sm:$0xff]
        %v2347 = vld [vmem:[#allocation14 + $0x1b0] sm:$0xff]
        %v2348 = vld [vmem:[#allocation14 + $0x1b8] sm:$0xff]
        %v2349 = vld [vmem:[#allocation14 + $0x1c0] sm:$0xff]
        %v2350 = vld [vmem:[#allocation14 + $0x1c8] sm:$0xff]
        %v2351 = vld [vmem:[#allocation14 + $0x1d0] sm:$0xff]
        %v2352 = vld [vmem:[#allocation14 + $0x1d8] sm:$0xff]
        %v2353 = vld [vmem:[#allocation14 + $0x1e0] sm:$0xff]
        %v2354 = vld [vmem:[#allocation14 + $0x1e8] sm:$0xff]
        %v2355 = vld [vmem:[#allocation14 + $0x1f0] sm:$0xff]
        %v2356 = vld [vmem:[#allocation14 + $0x1f8] sm:$0xff]
        %v2357 = vld [vmem:[%s15] sm:$0x3]
        %v2359 = vlaneseq
        %v2360 = vshrl.u32 %v2359, 7
        %v2361 = vsub.s32 0, %v2360
        %v2362 = vrot.slane %v2357, %v2361
        %v2363 = vlaneseq
        %v2364 = vshrl.u32 %v2363, 7
        %v2365 = vsub.s32 1, %v2364
        %v2366 = vrot.slane %v2357, %v2365
        %v2433 = vunpack.c.l.b16 %v2293
        %v2434 = vunpack.c.h.b16 %v2293
        %v2435 = vunpack.c.l.b16 %v2294
        %v2436 = vunpack.c.h.b16 %v2294
        %v2437 = vunpack.c.l.b16 %v2295
        %v2438 = vunpack.c.h.b16 %v2295
        %v2439 = vunpack.c.l.b16 %v2296
        %v2440 = vunpack.c.h.b16 %v2296
        %v2441 = vunpack.c.l.b16 %v2297
        %v2442 = vunpack.c.h.b16 %v2297
        %v2443 = vunpack.c.l.b16 %v2298
        %v2444 = vunpack.c.h.b16 %v2298
        %v2445 = vunpack.c.l.b16 %v2299
        %v2446 = vunpack.c.h.b16 %v2299
        %v2447 = vunpack.c.l.b16 %v2300
        %v2448 = vunpack.c.h.b16 %v2300
        %v2449 = vunpack.c.l.b16 %v2301
        %v2450 = vunpack.c.h.b16 %v2301
        %v2451 = vunpack.c.l.b16 %v2302
        %v2452 = vunpack.c.h.b16 %v2302
        %v2453 = vunpack.c.l.b16 %v2303
        %v2454 = vunpack.c.h.b16 %v2303
        %v2455 = vunpack.c.l.b16 %v2304
        %v2456 = vunpack.c.h.b16 %v2304
        %v2457 = vunpack.c.l.b16 %v2305
        %v2458 = vunpack.c.h.b16 %v2305
        %v2459 = vunpack.c.l.b16 %v2306
        %v2460 = vunpack.c.h.b16 %v2306
        %v2461 = vunpack.c.l.b16 %v2307
        %v2462 = vunpack.c.h.b16 %v2307
        %v2463 = vunpack.c.l.b16 %v2308
        %v2464 = vunpack.c.h.b16 %v2308
        %v2465 = vunpack.c.l.b16 %v2309
        %v2466 = vunpack.c.h.b16 %v2309
        %v2467 = vunpack.c.l.b16 %v2310
        %v2468 = vunpack.c.h.b16 %v2310
        %v2469 = vunpack.c.l.b16 %v2311
        %v2470 = vunpack.c.h.b16 %v2311
        %v2471 = vunpack.c.l.b16 %v2312
        %v2472 = vunpack.c.h.b16 %v2312
        %v2473 = vunpack.c.l.b16 %v2313
        %v2474 = vunpack.c.h.b16 %v2313
        %v2475 = vunpack.c.l.b16 %v2314
        %v2476 = vunpack.c.h.b16 %v2314
        %v2477 = vunpack.c.l.b16 %v2315
        %v2478 = vunpack.c.h.b16 %v2315
        %v2479 = vunpack.c.l.b16 %v2316
        %v2480 = vunpack.c.h.b16 %v2316
        %v2481 = vunpack.c.l.b16 %v2317
        %v2482 = vunpack.c.h.b16 %v2317
        %v2483 = vunpack.c.l.b16 %v2318
        %v2484 = vunpack.c.h.b16 %v2318
        %v2485 = vunpack.c.l.b16 %v2319
        %v2486 = vunpack.c.h.b16 %v2319
        %v2487 = vunpack.c.l.b16 %v2320
        %v2488 = vunpack.c.h.b16 %v2320
        %v2489 = vunpack.c.l.b16 %v2321
        %v2490 = vunpack.c.h.b16 %v2321
        %v2491 = vunpack.c.l.b16 %v2322
        %v2492 = vunpack.c.h.b16 %v2322
        %v2493 = vunpack.c.l.b16 %v2323
        %v2494 = vunpack.c.h.b16 %v2323
        %v2495 = vunpack.c.l.b16 %v2324
        %v2496 = vunpack.c.h.b16 %v2324
        %v2497 = vunpack.c.l.b16 %v2325
        %v2498 = vunpack.c.h.b16 %v2325
        %v2499 = vunpack.c.l.b16 %v2326
        %v2500 = vunpack.c.h.b16 %v2326
        %v2501 = vunpack.c.l.b16 %v2327
        %v2502 = vunpack.c.h.b16 %v2327
        %v2503 = vunpack.c.l.b16 %v2328
        %v2504 = vunpack.c.h.b16 %v2328
        %v2505 = vunpack.c.l.b16 %v2329
        %v2506 = vunpack.c.h.b16 %v2329
        %v2507 = vunpack.c.l.b16 %v2330
        %v2508 = vunpack.c.h.b16 %v2330
        %v2509 = vunpack.c.l.b16 %v2331
        %v2510 = vunpack.c.h.b16 %v2331
        %v2511 = vunpack.c.l.b16 %v2332
        %v2512 = vunpack.c.h.b16 %v2332
        %v2513 = vunpack.c.l.b16 %v2333
        %v2514 = vunpack.c.h.b16 %v2333
        %v2515 = vunpack.c.l.b16 %v2334
        %v2516 = vunpack.c.h.b16 %v2334
        %v2517 = vunpack.c.l.b16 %v2335
        %v2518 = vunpack.c.h.b16 %v2335
        %v2519 = vunpack.c.l.b16 %v2336
        %v2520 = vunpack.c.h.b16 %v2336
        %v2521 = vunpack.c.l.b16 %v2337
        %v2522 = vunpack.c.h.b16 %v2337
        %v2523 = vunpack.c.l.b16 %v2338
        %v2524 = vunpack.c.h.b16 %v2338
        %v2525 = vunpack.c.l.b16 %v2339
        %v2526 = vunpack.c.h.b16 %v2339
        %v2527 = vunpack.c.l.b16 %v2340
        %v2528 = vunpack.c.h.b16 %v2340
        %v2529 = vunpack.c.l.b16 %v2341
        %v2530 = vunpack.c.h.b16 %v2341
        %v2531 = vunpack.c.l.b16 %v2342
        %v2532 = vunpack.c.h.b16 %v2342
        %v2533 = vunpack.c.l.b16 %v2343
        %v2534 = vunpack.c.h.b16 %v2343
        %v2535 = vunpack.c.l.b16 %v2344
        %v2536 = vunpack.c.h.b16 %v2344
        %v2537 = vunpack.c.l.b16 %v2345
        %v2538 = vunpack.c.h.b16 %v2345
        %v2539 = vunpack.c.l.b16 %v2346
        %v2540 = vunpack.c.h.b16 %v2346
        %v2541 = vunpack.c.l.b16 %v2347
        %v2542 = vunpack.c.h.b16 %v2347
        %v2543 = vunpack.c.l.b16 %v2348
        %v2544 = vunpack.c.h.b16 %v2348
        %v2545 = vunpack.c.l.b16 %v2349
        %v2546 = vunpack.c.h.b16 %v2349
        %v2547 = vunpack.c.l.b16 %v2350
        %v2548 = vunpack.c.h.b16 %v2350
        %v2549 = vunpack.c.l.b16 %v2351
        %v2550 = vunpack.c.h.b16 %v2351
        %v2551 = vunpack.c.l.b16 %v2352
        %v2552 = vunpack.c.h.b16 %v2352
        %v2553 = vunpack.c.l.b16 %v2353
        %v2554 = vunpack.c.h.b16 %v2353
        %v2555 = vunpack.c.l.b16 %v2354
        %v2556 = vunpack.c.h.b16 %v2354
        %v2557 = vunpack.c.l.b16 %v2355
        %v2558 = vunpack.c.h.b16 %v2355
        %v2559 = vunpack.c.l.b16 %v2356
        %v2560 = vunpack.c.h.b16 %v2356
        %v2561 = vpack.c.b16 %v2435, %v2433
        %v2562 = vpack.c.b16 %v2436, %v2434
        %v2563 = vpack.c.b16 %v2439, %v2437
        %v2564 = vpack.c.b16 %v2440, %v2438
        %v2565 = vpack.c.b16 %v2443, %v2441
        %v2566 = vpack.c.b16 %v2444, %v2442
        %v2567 = vpack.c.b16 %v2447, %v2445
        %v2568 = vpack.c.b16 %v2448, %v2446
        %v2569 = vpack.c.b16 %v2451, %v2449
        %v2570 = vpack.c.b16 %v2452, %v2450
        %v2571 = vpack.c.b16 %v2455, %v2453
        %v2572 = vpack.c.b16 %v2456, %v2454
        %v2573 = vpack.c.b16 %v2459, %v2457
        %v2574 = vpack.c.b16 %v2460, %v2458
        %v2575 = vpack.c.b16 %v2463, %v2461
        %v2576 = vpack.c.b16 %v2464, %v2462
        %v2577 = vpack.c.b16 %v2467, %v2465
        %v2578 = vpack.c.b16 %v2468, %v2466
        %v2579 = vpack.c.b16 %v2471, %v2469
        %v2580 = vpack.c.b16 %v2472, %v2470
        %v2581 = vpack.c.b16 %v2475, %v2473
        %v2582 = vpack.c.b16 %v2476, %v2474
        %v2583 = vpack.c.b16 %v2479, %v2477
        %v2584 = vpack.c.b16 %v2480, %v2478
        %v2585 = vpack.c.b16 %v2483, %v2481
        %v2586 = vpack.c.b16 %v2484, %v2482
        %v2587 = vpack.c.b16 %v2487, %v2485
        %v2588 = vpack.c.b16 %v2488, %v2486
        %v2589 = vpack.c.b16 %v2491, %v2489
        %v2590 = vpack.c.b16 %v2492, %v2490
        %v2591 = vpack.c.b16 %v2495, %v2493
        %v2592 = vpack.c.b16 %v2496, %v2494
        %v2593 = vpack.c.b16 %v2499, %v2497
        %v2594 = vpack.c.b16 %v2500, %v2498
        %v2595 = vpack.c.b16 %v2503, %v2501
        %v2596 = vpack.c.b16 %v2504, %v2502
        %v2597 = vpack.c.b16 %v2507, %v2505
        %v2598 = vpack.c.b16 %v2508, %v2506
        %v2599 = vpack.c.b16 %v2511, %v2509
        %v2600 = vpack.c.b16 %v2512, %v2510
        %v2601 = vpack.c.b16 %v2515, %v2513
        %v2602 = vpack.c.b16 %v2516, %v2514
        %v2603 = vpack.c.b16 %v2519, %v2517
        %v2604 = vpack.c.b16 %v2520, %v2518
        %v2605 = vpack.c.b16 %v2523, %v2521
        %v2606 = vpack.c.b16 %v2524, %v2522
        %v2607 = vpack.c.b16 %v2527, %v2525
        %v2608 = vpack.c.b16 %v2528, %v2526
        %v2609 = vpack.c.b16 %v2531, %v2529
        %v2610 = vpack.c.b16 %v2532, %v2530
        %v2611 = vpack.c.b16 %v2535, %v2533
        %v2612 = vpack.c.b16 %v2536, %v2534
        %v2613 = vpack.c.b16 %v2539, %v2537
        %v2614 = vpack.c.b16 %v2540, %v2538
        %v2615 = vpack.c.b16 %v2543, %v2541
        %v2616 = vpack.c.b16 %v2544, %v2542
        %v2617 = vpack.c.b16 %v2547, %v2545
        %v2618 = vpack.c.b16 %v2548, %v2546
        %v2619 = vpack.c.b16 %v2551, %v2549
        %v2620 = vpack.c.b16 %v2552, %v2550
        %v2621 = vpack.c.b16 %v2555, %v2553
        %v2622 = vpack.c.b16 %v2556, %v2554
        %v2623 = vpack.c.b16 %v2559, %v2557
        %v2624 = vpack.c.b16 %v2560, %v2558
        %2689 = vmatprep.subr.bf16.mxu0 %v2576
        %2690 = vmatpush1.bf16.msra.mxu0 %v2575
        %2691 = vmatprep.subr.bf16.mxu0 %v2574
        %2692 = vmatpush1.bf16.msra.mxu0 %v2573
        %2693 = vmatprep.subr.bf16.mxu0 %v2572
        %2694 = vmatpush1.bf16.msra.mxu0 %v2571
        %2695 = vmatprep.subr.bf16.mxu0 %v2570
        %2696 = vmatpush1.bf16.msra.mxu0 %v2569
        %2697 = vmatprep.subr.bf16.mxu0 %v2568
        %2698 = vmatpush1.bf16.msra.mxu0 %v2567
        %2699 = vmatprep.subr.bf16.mxu0 %v2566
        %2700 = vmatpush1.bf16.msra.mxu0 %v2565
        %2701 = vmatprep.subr.bf16.mxu0 %v2564
        %2702 = vmatpush1.bf16.msra.mxu0 %v2563
        %2703 = vmatprep.subr.bf16.mxu0 %v2562
        %2704 = vmatpush1.bf16.msra.mxu0 %v2561
        %2705 = vmatprep.subr.bf16.mxu0 %v2592
        %2706 = vmatpush2.bf16.msra.mxu0 %v2591
        %2707 = vmatprep.subr.bf16.mxu0 %v2590
        %2708 = vmatpush2.bf16.msra.mxu0 %v2589
        %2709 = vmatprep.subr.bf16.mxu0 %v2588
        %2710 = vmatpush2.bf16.msra.mxu0 %v2587
        %2711 = vmatprep.subr.bf16.mxu0 %v2586
        %2712 = vmatpush2.bf16.msra.mxu0 %v2585
        %2713 = vmatprep.subr.bf16.mxu0 %v2584
        %2714 = vmatpush2.bf16.msra.mxu0 %v2583
        %2715 = vmatprep.subr.bf16.mxu0 %v2582
        %2716 = vmatpush2.bf16.msra.mxu0 %v2581
        %2717 = vmatprep.subr.bf16.mxu0 %v2580
        %2718 = vmatpush2.bf16.msra.mxu0 %v2579
        %2719 = vmatprep.subr.bf16.mxu0 %v2578
        %2720 = vmatpush2.bf16.msra.mxu0 %v2577
        %2721 = vmatprep.mubr.bf16.mxu0 %v2290
        %2722 = vmatmul.mubr.bf16.gmra.mxu0 %v2289
        %v2723 = vpop.f32.mrf.mxu0
        %v2724 = vadd.f32 %v2362, %v2723
        %v2725 = vpop.f32.mrf.mxu0
        %v2726 = vadd.f32 %v2366, %v2725
        %v2727 = vpop.f32.mrf.mxu0
        %v2728 = vpop.f32.mrf.mxu0
        %2729 = vdwg.mxu0
        %2730 = vmatprep.subr.bf16.mxu0 %v2608
        %2731 = vmatpush1.bf16.msra.mxu0 %v2607
        %2732 = vmatprep.subr.bf16.mxu0 %v2606
        %2733 = vmatpush1.bf16.msra.mxu0 %v2605
        %2734 = vmatprep.subr.bf16.mxu0 %v2604
        %2735 = vmatpush1.bf16.msra.mxu0 %v2603
        %2736 = vmatprep.subr.bf16.mxu0 %v2602
        %2737 = vmatpush1.bf16.msra.mxu0 %v2601
        %2738 = vmatprep.subr.bf16.mxu0 %v2600
        %2739 = vmatpush1.bf16.msra.mxu0 %v2599
        %2740 = vmatprep.subr.bf16.mxu0 %v2598
        %2741 = vmatpush1.bf16.msra.mxu0 %v2597
        %2742 = vmatprep.subr.bf16.mxu0 %v2596
        %2743 = vmatpush1.bf16.msra.mxu0 %v2595
        %2744 = vmatprep.subr.bf16.mxu0 %v2594
        %2745 = vmatpush1.bf16.msra.mxu0 %v2593
        %2746 = vmatprep.subr.bf16.mxu0 %v2624
        %2747 = vmatpush2.bf16.msra.mxu0 %v2623
        %2748 = vmatprep.subr.bf16.mxu0 %v2622
        %2749 = vmatpush2.bf16.msra.mxu0 %v2621
        %2750 = vmatprep.subr.bf16.mxu0 %v2620
        %2751 = vmatpush2.bf16.msra.mxu0 %v2619
        %2752 = vmatprep.subr.bf16.mxu0 %v2618
        %2753 = vmatpush2.bf16.msra.mxu0 %v2617
        %2754 = vmatprep.subr.bf16.mxu0 %v2616
        %2755 = vmatpush2.bf16.msra.mxu0 %v2615
        %2756 = vmatprep.subr.bf16.mxu0 %v2614
        %2757 = vmatpush2.bf16.msra.mxu0 %v2613
        %2758 = vmatprep.subr.bf16.mxu0 %v2612
        %2759 = vmatpush2.bf16.msra.mxu0 %v2611
        %2760 = vmatprep.subr.bf16.mxu0 %v2610
        %2761 = vmatpush2.bf16.msra.mxu0 %v2609
        %2762 = vmatprep.mubr.bf16.mxu0 %v2292
        %2763 = vmatmul.mubr.bf16.gmra.mxu0 %v2291
        %v2764 = vpop.f32.mrf.mxu0
        %v2765 = vadd.f32 %v2724, %v2764
        %v2766 = vpop.f32.mrf.mxu0
        %v2767 = vadd.f32 %v2726, %v2766
        %v2768 = vpop.f32.mrf.mxu0
        %v2769 = vpop.f32.mrf.mxu0
        %2770 = vdwg.mxu0
        %2771 = vst [vmem:[%s723] sm:$0xff] %v2765
        %2772 = vst [vmem:[%s723 + $0x8] sm:$0xff] %v2767
        %2773 = vst [vmem:[%s730] sm:$0xff] %v1866
        %2774 = vst [vmem:[%s737] sm:$0xff] %v1867
        %s2775 = sand.u32 %s402, 1
        %s2776 = scalar_lea.sflag [#allocation4], %s2775
        %s2777 = sand.u32 %s402, 1
        %s2778 = smul.addr %s2777, 16
        %s2779 = scalar_lea.vmem [#allocation16], %s2778
        %s2780 = sand.u32 %s43, 1
        %s2781 = scalar_lea.sflag [#allocation18], %s2780
        %s2782 = sand.u32 %s428, 1
        %s2783 = smul.addr %s2782, 8
        %s2784 = scalar_lea.vmem [#allocation17], %s2783
        %s2785 = sand.u32 %s43, 1
        %s2786 = scalar_lea.sflag [#allocation18], %s2785
        %s2787 = sand.u32 %s454, 1
        %s2788 = smul.addr %s2787, 8
        %s2789 = scalar_lea.vmem [#allocation19], %s2788
        // Predicated region
        $region117: #{tpu_custom_call.1} parent=83 // pred_check
          %p2790 = pneg %p412
        $region118: #{tpu_custom_call.1} parent=83 // pred_check_branch
          %2792 = sbr.rel (%p2790) target = $region120
        $region119: #{tpu_custom_call.1} parent=83 // pred_region
          %s2794 = ssub.s32 256, 256
          %2795 = vsyncadd %s2776, %s2794
          %s2796 = smul.addr %s43, 2
          %s2797 = smul.addr %s2796, 128
          %s2798 = scalar_lea.hbm %s16, %s2797
          %s2800 = sshll.u32 %s2779, 4
          %s2801 = int_to_ptr.vmem [resolvable:$true] %s2800
          %2803 = dma.vmem_to_hbm [thread:$0]  %s2801, 256, %s2798, %s2776
        $region120: #{tpu_custom_call.1} parent=83 // pred_fallthru
          _
        // Predicated region
        $region121: #{tpu_custom_call.1} parent=83 // pred_check
          %p2804 = pneg %p438
        $region122: #{tpu_custom_call.1} parent=83 // pred_check_branch
          %2806 = sbr.rel (%p2804) target = $region124
        $region123: #{tpu_custom_call.1} parent=83 // pred_region
          %s2808 = ssub.s32 128, 128
          %2809 = vsyncadd %s2781, %s2808
          %s2810 = smul.addr %s43, 128
          %s2811 = scalar_lea.hbm %s17, %s2810
          %s2813 = sshll.u32 %s2784, 4
          %s2814 = int_to_ptr.vmem [resolvable:$true] %s2813
          %2816 = dma.vmem_to_hbm [thread:$0]  %s2814, 128, %s2811, %s2781
        $region124: #{tpu_custom_call.1} parent=83 // pred_fallthru
          _
        // Predicated region
        $region125: #{tpu_custom_call.1} parent=83 // pred_check
          %p2817 = pneg %p464
        $region126: #{tpu_custom_call.1} parent=83 // pred_check_branch
          %2819 = sbr.rel (%p2817) target = $region128
        $region127: #{tpu_custom_call.1} parent=83 // pred_region
          %s2821 = ssub.s32 128, 128
          %2822 = vsyncadd %s2786, %s2821
          %s2823 = smul.addr %s43, 128
          %s2824 = scalar_lea.hbm %s18, %s2823
          %s2826 = sshll.u32 %s2789, 4
          %s2827 = int_to_ptr.vmem [resolvable:$true] %s2826
          %2829 = dma.vmem_to_hbm [thread:$0]  %s2827, 128, %s2824, %s2786
        $region128: #{tpu_custom_call.1} parent=83 // pred_fallthru
          _
      $region84: #{tpu_custom_call.1} parent=5 // pred_fallthru
        _
      %p2830 = scmp.le.s32.totalorder 2, %s38
      // Predicated region
      $region129: #{tpu_custom_call.1} parent=5 // pred_check
        %p2831 = pneg %p2830
      $region130: #{tpu_custom_call.1} parent=5 // pred_check_branch
        %2833 = sbr.rel (%p2831) target = $region132
      $region131: #{tpu_custom_call.1} parent=5 // pred_region
        %s2834 = ssub.s32 %s38, 2
        // Predicated region
        $region133: #{tpu_custom_call.1} parent=131 // pred_check
          %p2835 = pneg %p418
        $region134: #{tpu_custom_call.1} parent=131 // pred_check_branch
          %2837 = sbr.rel (%p2835) target = $region136
        $region135: #{tpu_custom_call.1} parent=131 // pred_region
          %s2838 = sand.u32 %s403, 1
          %s2839 = scalar_lea.sflag [#allocation4], %s2838
          %s2840 = sand.u32 %s403, 1
          %s2841 = smul.addr %s2840, 16
          %s2842 = scalar_lea.vmem [#allocation16], %s2841
          %2843 = dma.done %s2839, 256
        $region136: #{tpu_custom_call.1} parent=131 // pred_fallthru
          _
        // Predicated region
        $region137: #{tpu_custom_call.1} parent=131 // pred_check
          %p2844 = pneg %p444
        $region138: #{tpu_custom_call.1} parent=131 // pred_check_branch
          %2846 = sbr.rel (%p2844) target = $region140
        $region139: #{tpu_custom_call.1} parent=131 // pred_region
          %s2847 = sand.u32 %s44, 1
          %s2848 = scalar_lea.sflag [#allocation18], %s2847
          %s2849 = sand.u32 %s429, 1
          %s2850 = smul.addr %s2849, 8
          %s2851 = scalar_lea.vmem [#allocation17], %s2850
          %2852 = dma.done %s2848, 128
        $region140: #{tpu_custom_call.1} parent=131 // pred_fallthru
          _
        // Predicated region
        $region141: #{tpu_custom_call.1} parent=131 // pred_check
          %p2853 = pneg %p470
        $region142: #{tpu_custom_call.1} parent=131 // pred_check_branch
          %2855 = sbr.rel (%p2853) target = $region144
        $region143: #{tpu_custom_call.1} parent=131 // pred_region
          %s2856 = sand.u32 %s44, 1
          %s2857 = scalar_lea.sflag [#allocation18], %s2856
          %s2858 = sand.u32 %s455, 1
          %s2859 = smul.addr %s2858, 8
          %s2860 = scalar_lea.vmem [#allocation19], %s2859
          %2861 = dma.done %s2857, 128
        $region144: #{tpu_custom_call.1} parent=131 // pred_fallthru
          _
      $region132: #{tpu_custom_call.1} parent=5 // pred_fallthru
        _
    $region6: #{tpu_custom_call.1} parent=1 // loop_footer
      %s42 = sadd.s32 1, %s38
    $region7: #{tpu_custom_call.1} parent=1 // loop_footer_branch
      %37 = sbr.rel target = $region3
    $region8: #{tpu_custom_call.1} parent=1 // loop_exit
      _
    %2862 = vsyncpa [#allocation3], 1
    %s2863 = scalar_lea.sflag [#allocation3], 1
    %2864 = vsyncpa %s2863, 1
    %2865 = vsyncpa [#allocation6], 1
    %2866 = vsyncpa [#allocation9], 1
    %2867 = vsyncpa [#allocation12], 1
    %2868 = vsyncpa [#allocation15], 1
    %2869 = vsyncpa [#allocation4], 1
    %s2870 = scalar_lea.sflag [#allocation4], 1
    %2871 = vsyncpa %s2870, 1
    %2872 = vsyncpa [#allocation18], 1
    %s2873 = scalar_lea.sflag [#allocation18], 1
    %2874 = vsyncpa %s2873, 1

</llo_original>
